<compile_context>
chip_gen: v7x
topology: tpu7x:2x2x1
jax: 0.10.0
libtpu: 0.0.40
codegen_flags: <defaults>
</compile_context>

<pallas_src>
import math
import numpy as np
import jax
import jax.numpy as jnp
from jax.experimental import pallas as pl
from jax.experimental.pallas import tpu as pltpu

PAD = 128          # lane width of every packed activation / weight
H_BLK = 32         # per-network hidden-column block (requires hidden dims <= 32)
LAT_BLK = 16       # per-encoder mu/logvar column block (requires latent dims <= 16)
LV_OFF = 64        # logvar half of the heads slab
RECON_Y_OFF = 64   # recon_y columns start here in the recon output slab

# mu-lane offset of each latent inside the heads / sample slabs
MU_OFF = {"s": 0, "z_x": LAT_BLK, "z_y": 2 * LAT_BLK, "z_x_infer": 3 * LAT_BLK}

N_WENC = 4         # packed encoder matmuls  (E1, E2, E3, E4=mu|logvar heads)
N_WREST = 6        # packed MLP3 + decoder matmuls (M1, M2, M3, D1, D2, D3)
N_STAGE = 10       # total bias slabs
N_OUT_SLABS = 3    # [mus+logvars, samples, recon]


# -----------------------------------------------------------------------------
# Fused kernel
# -----------------------------------------------------------------------------

def _dual_vae_kernel(xin_ref, eps_ref, wenc_ref, bias_ref, wrest_hbm_ref,
                     out_ref, wrest_vmem, sem):
    # Start pulling the MLP3/decoder weight slab into VMEM while the encoder
    # chain runs (re-issued per batch tile so it stays correct when the
    # "parallel" grid axis is split across TensorCores; ~200 KB, fully hidden).
    cp = pltpu.make_async_copy(wrest_hbm_ref, wrest_vmem, sem.at[0])
    cp.start()

    xin = xin_ref[...]                                   # [bt, PAD]  (x | y | 0)
    eps = eps_ref[...]                                   # [bt, PAD]  packed noise

    def dot_b(h, w, bi, relu):
        # bf16 x bf16 MXU matmul with f32 accumulation; bias add in f32.
        r = jnp.dot(h.astype(jnp.bfloat16), w,
                    preferred_element_type=jnp.float32) + bias_ref[bi]
        return jnp.maximum(r, 0.0) if relu else r

    # ---- all 4 encoders, column/block packed: 4 serial matmuls --------------
    h = dot_b(xin, wenc_ref[0], 0, True)                 # hidden1 of 4 encoders
    h = dot_b(h, wenc_ref[1], 1, True)                   # hidden2 (block diag)
    z = dot_b(h, wenc_ref[2], 2, False)                  # latents (block diag)
    heads = dot_b(z, wenc_ref[3], 3, False)              # mus@0..63 | logvars@64..127

    # ---- reparameterize all 4 latents in one shot ----------------------------
    # std = exp(0.5*logvar) + 1e-7, eps ~ N(0,1)  (matches torch exactly)
    lanes = jax.lax.broadcasted_iota(jnp.int32, (1, PAD), 1)
    lv = jnp.where(lanes < LV_OFF, pltpu.roll(heads, shift=LV_OFF, axis=1), 0.0)
    std = jnp.exp(0.5 * lv) + 1e-7
    phase_a = heads + eps * std     # s@0..3, zx_res-sampled@16.., zy@32.., zxi@48..

    cp.wait()                       # MLP3 / decoder weights now resident

    # ---- both structural MLPs, packed: 3 matmuls -----------------------------
    m = dot_b(phase_a, wrest_vmem[0], 4, True)           # reads s (rows 0..s_dim)
    m = dot_b(m, wrest_vmem[1], 5, True)
    m = dot_b(m, wrest_vmem[2], 6, False)                # struct mus @ zx/zy lanes

    mus = heads + m                 # final mus (+ untouched logvars @ 64..127)
    zall = phase_a + m              # samples: s, z_x, z_y, z_x_infer at mu lanes

    # ---- both decoders, packed & concat-free: 3 matmuls ----------------------
    d = dot_b(zall, wrest_vmem[3], 7, True)              # rows = z-lane + s-lane blocks
    d = dot_b(d, wrest_vmem[4], 8, True)
    d = dot_b(d, wrest_vmem[5], 9, False)                # recon_x@0.., recon_y@64..

    out_ref[0] = mus
    out_ref[1] = zall
    out_ref[2] = d


# -----------------------------------------------------------------------------
# Parameter init (PyTorch-default-style uniform) + packing
# -----------------------------------------------------------------------------

def _init_linear(key, din, dout):
    k1, k2 = jax.random.split(key)
    bound = 1.0 / math.sqrt(din)
    w = jax.random.uniform(k1, (din, dout), jnp.float32, -bound, bound)
    b = jax.random.uniform(k2, (dout,), jnp.float32, -bound, bound)
    return w, b


def init_dual_vae_params(key, state_dim, action_dim, reward_dim, z_dim, s_dim, hidden):
    in_x = state_dim + action_dim
    in_y = reward_dim + state_dim
    h1, h2 = hidden
    assert h1 <= H_BLK and h2 <= H_BLK, "packed layout assumes hidden dims <= 32"
    assert max(z_dim, s_dim) <= LAT_BLK, "packed layout assumes latent dims <= 16"
    assert in_x + in_y <= PAD and in_x <= RECON_Y_OFF and in_y <= PAD - RECON_Y_OFF
    assert state_dim <= in_x  # inference encoder consumes x[:, :state_dim]

    keys = iter(jax.random.split(key, 64))

    def lin(din, dout):
        return _init_linear(next(keys), din, dout)

    def mlp3(din, dout):
        w1, b1 = lin(din, h1); w2, b2 = lin(h1, h2); w3, b3 = lin(h2, dout)
        return dict(w1=w1, b1=b1, w2=w2, b2=b2, w3=w3, b3=b3)

    def enc(din, lat):
        p = mlp3(din, lat)
        p["wmu"], p["bmu"] = lin(lat, lat)
        p["wlv"], p["blv"] = lin(lat, lat)
        return p

    raw = {
        "enc_s": enc(in_x + in_y, s_dim),
        "res_x": enc(in_x, z_dim),
        "res_y": enc(in_y, z_dim),
        "inf":   enc(state_dim, z_dim),
        "seq_zx": mlp3(s_dim, z_dim),
        "seq_zy": mlp3(s_dim, z_dim),
        "dec_x": mlp3(z_dim + s_dim, in_x),
        "dec_y": mlp3(z_dim + s_dim, in_y),
    }
    packed = _pack_params(raw, state_dim, in_x, in_y, h1, h2, z_dim, s_dim)
    return {"raw": raw, **packed}


def _pack_params(raw, state_dim, in_x, in_y, h1, h2, z_dim, s_dim):
    names = ("E1", "E2", "E3", "E4", "M1", "M2", "M3", "D1", "D2", "D3")
    W = {n: np.zeros((PAD, PAD), np.float32) for n in names}
    b = {n: np.zeros((PAD,), np.float32) for n in names}

    # --- 4 encoders: column-blocked W1, block-diag W2/W3, fused mu|logvar heads
    enc_rows = {"enc_s": (0, in_x + in_y), "res_x": (0, in_x),
                "res_y": (in_x, in_x + in_y), "inf": (0, state_dim)}
    enc_lat = {"enc_s": s_dim, "res_x": z_dim, "res_y": z_dim, "inf": z_dim}
    for k, name in enumerate(("enc_s", "res_x", "res_y", "inf")):
        p = {kk: np.asarray(v) for kk, v in raw[name].items()}
        r0, r1 = enc_rows[name]
        lat = enc_lat[name]
        c, m = k * H_BLK, k * LAT_BLK
        W["E1"][r0:r1, c:c + h1] = p["w1"];      b["E1"][c:c + h1] = p["b1"]
        W["E2"][c:c + h1, c:c + h2] = p["w2"];   b["E2"][c:c + h2] = p["b2"]
        W["E3"][c:c + h2, c:c + lat] = p["w3"];  b["E3"][c:c + lat] = p["b3"]
        W["E4"][c:c + lat, m:m + lat] = p["wmu"]; b["E4"][m:m + lat] = p["bmu"]
        W["E4"][c:c + lat, LV_OFF + m:LV_OFF + m + lat] = p["wlv"]
        b["E4"][LV_OFF + m:LV_OFF + m + lat] = p["blv"]

    # --- 2 structural MLPs: read s (lanes 0..s_dim), write struct-mu at zx/zy lanes
    for k, (name, mu_col) in enumerate((("seq_zx", MU_OFF["z_x"]),
                                        ("seq_zy", MU_OFF["z_y"]))):
        p = {kk: np.asarray(v) for kk, v in raw[name].items()}
        c = k * H_BLK
        W["M1"][0:s_dim, c:c + h1] = p["w1"];    b["M1"][c:c + h1] = p["b1"]
        W["M2"][c:c + h1, c:c + h2] = p["w2"];   b["M2"][c:c + h2] = p["b2"]
        W["M3"][c:c + h2, mu_col:mu_col + z_dim] = p["w3"]
        b["M3"][mu_col:mu_col + z_dim] = p["b3"]

    # --- 2 decoders: concat-free W1 (z-rows at the z lanes, s-rows at lanes 0..s_dim)
    for k, (name, z_row, out_col, dout) in enumerate(
            (("dec_x", MU_OFF["z_x"], 0, in_x),
             ("dec_y", MU_OFF["z_y"], RECON_Y_OFF, in_y))):
        p = {kk: np.asarray(v) for kk, v in raw[name].items()}
        c = k * H_BLK
        W["D1"][z_row:z_row + z_dim, c:c + h1] = p["w1"][:z_dim]   # z part of cat([z, s])
        W["D1"][0:s_dim, c:c + h1] = p["w1"][z_dim:]               # s part (shared bias)
        b["D1"][c:c + h1] = p["b1"]
        W["D2"][c:c + h1, c:c + h2] = p["w2"];   b["D2"][c:c + h2] = p["b2"]
        W["D3"][c:c + h2, out_col:out_col + dout] = p["w3"]
        b["D3"][out_col:out_col + dout] = p["b3"]

    enc_names, rest_names = names[:N_WENC], names[N_WENC:]
    w_enc = jnp.asarray(np.stack([W[n] for n in enc_names]), jnp.bfloat16)
    w_rest = jnp.asarray(np.stack([W[n] for n in rest_names]), jnp.bfloat16)
    bias = jnp.asarray(np.stack([b[n] for n in names])[:, None, :], jnp.float32)
    return {"W_enc": w_enc, "W_rest": w_rest, "bias": bias}


# -----------------------------------------------------------------------------
# Packing / unpacking of activations
# -----------------------------------------------------------------------------

def _pack_inputs(x, y, cfg, noise_key):
    """Lane-dense [B,128] (x|y) slab and a [B,128] eps slab (noise at the mu lanes)."""
    s_dim, z_dim = cfg["s_dim"], cfg["z_dim"]
    B, in_x = x.shape
    in_y = y.shape[1]
    xin = jnp.zeros((B, PAD), jnp.float32)
    xin = xin.at[:, :in_x].set(x.astype(jnp.float32))
    xin = xin.at[:, in_x:in_x + in_y].set(y.astype(jnp.float32))
    nk = jax.random.split(noise_key, 4)
    eps = jnp.zeros((B, PAD), jnp.float32)
    for k, (name, d) in zip(nk, (("s", s_dim), ("z_x", z_dim),
                                 ("z_y", z_dim), ("z_x_infer", z_dim))):
        off = MU_OFF[name]
        eps = eps.at[:, off:off + d].set(jax.random.normal(k, (B, d), jnp.float32))
    return xin, eps


def _unpack_outputs(out, cfg, in_x, in_y):
    s_dim, z_dim = cfg["s_dim"], cfg["z_dim"]
    dims = {"s": s_dim, "z_x": z_dim, "z_y": z_dim, "z_x_infer": z_dim}
    mean = {k: out[0, :, MU_OFF[k]:MU_OFF[k] + dims[k]] for k in dims}
    logvar = {k: out[0, :, LV_OFF + MU_OFF[k]:LV_OFF + MU_OFF[k] + dims[k]] for k in dims}
    sample = {k: out[1, :, MU_OFF[k]:MU_OFF[k] + dims[k]] for k in dims}
    recon = {"x": out[2, :, :in_x], "y": out[2, :, RECON_Y_OFF:RECON_Y_OFF + in_y]}
    return {"mean": mean, "logvar": logvar, "sample": sample, "recon": recon}


# -----------------------------------------------------------------------------
# Forward wrapper
# -----------------------------------------------------------------------------

def dual_vae_forward(params, x, y, cfg, noise_key, *, batch_tile=8):
    B = x.shape[0]
    in_x, in_y = x.shape[1], y.shape[1]
    xin, eps = _pack_inputs(x, y, cfg, noise_key)

    bt = min(batch_tile, B)
    assert bt % 8 == 0 and B % bt == 0, "batch must be a multiple of the 8-aligned tile"
    nb = B // bt

    w_enc, w_rest, bias = params["W_enc"], params["W_rest"], params["bias"]

    cost = pl.CostEstimate(
        flops=2 * B * PAD * PAD * (N_WENC + N_WREST),
        transcendentals=B * PAD,
        bytes_accessed=(2 * (w_enc.size + w_rest.size)        # bf16 weights
                        + 4 * bias.size
                        + 4 * (xin.size + eps.size + N_OUT_SLABS * B * PAD)),
    )

    out = pl.pallas_call(
        _dual_vae_kernel,
        out_shape=jax.ShapeDtypeStruct((N_OUT_SLABS, B, PAD), jnp.float32),
        grid=(nb,),
        in_specs=[
            pl.BlockSpec((bt, PAD), lambda i: (i, 0)),                 # x|y slab
            pl.BlockSpec((bt, PAD), lambda i: (i, 0)),                 # eps slab
            pl.BlockSpec((N_WENC, PAD, PAD), lambda i: (0, 0, 0)),     # encoder weights (resident)
            pl.BlockSpec((N_STAGE, 1, PAD), lambda i: (0, 0, 0)),      # all biases (resident)
            pl.BlockSpec(memory_space=pl.ANY),                         # MLP3/decoder weights (manual DMA)
        ],
        out_specs=pl.BlockSpec((N_OUT_SLABS, bt, PAD), lambda i: (0, i, 0)),
        scratch_shapes=[pltpu.VMEM((N_WREST, PAD, PAD), jnp.bfloat16),
                        pltpu.SemaphoreType.DMA((1,))],
        compiler_params=pltpu.CompilerParams(
            dimension_semantics=("parallel",),         # both TCs on v7x when nb > 1
            vmem_limit_bytes=8 * 1024 * 1024),
        cost_estimate=cost,
    )(xin, eps, w_enc, bias, w_rest)

    return _unpack_outputs(out, cfg, in_x, in_y)


# -----------------------------------------------------------------------------
# Independent plain-JAX reference: the *unpacked* original module structure
# (concat-based, per-submodule linears) on the raw weights.  Matmul inputs are
# rounded to bf16 to mirror the kernel's MXU-native bf16 x bf16 -> f32 dots.
# -----------------------------------------------------------------------------

def dual_vae_forward_ref(raw, x, y, cfg, noise_key):
    s_dim, z_dim, state_dim = cfg["s_dim"], cfg["z_dim"], cfg["state_dim"]
    _, eps = _pack_inputs(x, y, cfg, noise_key)   # same noise as the kernel

    def lin(h, w, bb, relu=False):
        r = jnp.dot(h.astype(jnp.bfloat16), w.astype(jnp.bfloat16),
                    preferred_element_type=jnp.float32) + bb
        return jnp.maximum(r, 0.0) if relu else r

    def mlp3(p, h):
        h = lin(h, p["w1"], p["b1"], True)
        h = lin(h, p["w2"], p["b2"], True)
        return lin(h, p["w3"], p["b3"])

    def encoder(p, h):
        z = mlp3(p, h)
        return lin(z, p["wmu"], p["bmu"]), lin(z, p["wlv"], p["blv"])

    def rep(mu, lv, e):
        return mu + e * (jnp.exp(0.5 * lv) + 1e-7)   # std = exp(0.5*logvar)+1e-7

    def eps_of(name, d):
        return eps[:, MU_OFF[name]:MU_OFF[name] + d]

    xy = jnp.concatenate([x, y], axis=1)
    s_mu, s_lv = encoder(raw["enc_s"], xy)
    s = rep(s_mu, s_lv, eps_of("s", s_dim))
    zx_st = mlp3(raw["seq_zx"], s)
    zy_st = mlp3(raw["seq_zy"], s)
    zxr_mu, zx_lv = encoder(raw["res_x"], x)
    zyr_mu, zy_lv = encoder(raw["res_y"], y)
    zx_mu = zx_st + zxr_mu
    zy_mu = zy_st + zyr_mu
    zx = rep(zx_mu, zx_lv, eps_of("z_x", z_dim))
    zy = rep(zy_mu, zy_lv, eps_of("z_y", z_dim))
    rx = mlp3(raw["dec_x"], jnp.concatenate([zx, s], axis=1))
    ry = mlp3(raw["dec_y"], jnp.concatenate([zy, s], axis=1))
    zxi_mu, zxi_lv = encoder(raw["inf"], x[:, :state_dim])
    zxi = rep(zxi_mu, zxi_lv, eps_of("z_x_infer", z_dim))

    return {"mean": {"s": s_mu, "z_x": zx_mu, "z_y": zy_mu, "z_x_infer": zxi_mu},
            "logvar": {"s": s_lv, "z_x": zx_lv, "z_y": zy_lv, "z_x_infer": zxi_lv},
            "sample": {"s": s, "z_x": zx, "z_y": zy, "z_x_infer": zxi},
            "recon": {"x": rx, "y": ry}}


# -----------------------------------------------------------------------------
# Demo
# -----------------------------------------------------------------------------

if __name__ == "__main__":
    state_dim, action_dim, reward_dim = 8, 4, 1
    z_dim, s_dim = 4, 4
    hidden = [32, 32]          # small demo sizes (module default [256,256])

    in_x = state_dim + action_dim      # 12
    in_y = reward_dim + state_dim      # 9
    cfg = dict(state_dim=state_dim, z_dim=z_dim, s_dim=s_dim)

    key = jax.random.PRNGKey(0)
    k_param, k_data, k_noise = jax.random.split(key, 3)
    params = init_dual_vae_params(k_param, state_dim, action_dim, reward_dim,
                                  z_dim, s_dim, hidden)

    # First run: single batch tile (grid=(1,)).  Second run: 4-step parallel
    # batch grid (exercises weight residency across tiles / megacore split).
    for batch, bt in ((8, 8), (32, 8)):
        kx, ky = jax.random.split(jax.random.fold_in(k_data, batch))
        x = jax.random.normal(kx, (batch, in_x), jnp.float32)
        y = jax.random.normal(ky, (batch, in_y), jnp.float32)

        fwd = jax.jit(lambda p, xx, yy, _bt=bt:
                      dual_vae_forward(p, xx, yy, cfg, k_noise, batch_tile=_bt))
        out = fwd(params, x, y)
        jax.block_until_ready(out)

        # Shape sanity checks.
        assert out["recon"]["x"].shape == (batch, in_x)
        assert out["recon"]["y"].shape == (batch, in_y)
        assert out["mean"]["s"].shape == (batch, s_dim)
        assert out["sample"]["z_x"].shape == (batch, z_dim)
        assert out["sample"]["z_x_infer"].shape == (batch, z_dim)

        # Structurally independent reference check (validates the block packing,
        # concat elimination, roll-based reparam, etc.).  Tolerance bound set by
        # bf16 matmul-input rounding (not an exact-f32 path), tightened 5x.
        ref = dual_vae_forward_ref(params["raw"], x, y, cfg, k_noise)
        for got, want in zip(jax.tree_util.tree_leaves(out),
                             jax.tree_util.tree_leaves(ref)):
            np.testing.assert_allclose(np.asarray(got), np.asarray(want),
                                       rtol=2e-3, atol=2e-3)

    print("KERNEL_OK")
</pallas_src>

<mosaic_0001>
module attributes {stable_mosaic.version = 11 : i64} {
  func.func @_dual_vae_kernel(%arg0: i32, %arg1: memref<8x128xf32, #tpu.memory_space<vmem>>, %arg2: memref<8x128xf32, #tpu.memory_space<vmem>>, %arg3: memref<4x128x128xbf16, #tpu.memory_space<vmem>>, %arg4: memref<10x1x128xf32, #tpu.memory_space<vmem>>, %arg5: memref<6x128x128xbf16, #tpu.memory_space<any>>, %arg6: memref<3x8x128xf32, #tpu.memory_space<vmem>>, %arg7: memref<6x128x128xbf16, #tpu.memory_space<vmem>>, %arg8: memref<1x!tpu.dma_semaphore, #tpu.memory_space<semaphore_mem>>) attributes {dimension_semantics = [#tpu.dimension_semantics<parallel>], iteration_bounds = array<i64: 1>, scalar_prefetch = 0 : i64, scratch_operands = 2 : i64, tpu.core_type = #tpu.core_type<tc>, window_params = [{transform_indices = @transform_0, window_bounds = array<i64: 8, 128>}, {transform_indices = @transform_1, window_bounds = array<i64: 8, 128>}, {pipeline_mode = #tpu.pipeline_mode<synchronous>, transform_indices = @transform_2, window_bounds = array<i64: 4, 128, 128>}, {pipeline_mode = #tpu.pipeline_mode<synchronous>, transform_indices = @transform_3, window_bounds = array<i64: 10, 1, 128>}, {}, {transform_indices = @transform_5, window_bounds = array<i64: 3, 8, 128>}]} {
    %c0_i32 = arith.constant 0 : i32
    %0 = tpu.memref_slice %arg8[%c0_i32] : memref<1x!tpu.dma_semaphore, #tpu.memory_space<semaphore_mem>> -> memref<1x!tpu.dma_semaphore, #tpu.memory_space<semaphore_mem>>
    %1 = tpu.memref_squeeze %0 : memref<1x!tpu.dma_semaphore, #tpu.memory_space<semaphore_mem>> -> memref<!tpu.dma_semaphore, #tpu.memory_space<semaphore_mem>>
    tpu.enqueue_dma source(%arg5 : memref<6x128x128xbf16, #tpu.memory_space<any>>) target(%arg7 : memref<6x128x128xbf16, #tpu.memory_space<vmem>>) target_semaphore(%1 : memref<!tpu.dma_semaphore, #tpu.memory_space<semaphore_mem>>)
    %c0 = arith.constant 0 : index
    %c0_0 = arith.constant 0 : index
    %2 = vector.load %arg1[%c0, %c0_0] : memref<8x128xf32, #tpu.memory_space<vmem>>, vector<8x128xf32>
    %c0_1 = arith.constant 0 : index
    %c0_2 = arith.constant 0 : index
    %3 = vector.load %arg2[%c0_1, %c0_2] : memref<8x128xf32, #tpu.memory_space<vmem>>, vector<8x128xf32>
    %c0_3 = arith.constant 0 : index
    %c0_4 = arith.constant 0 : index
    %c0_5 = arith.constant 0 : index
    %4 = vector.load %arg3[%c0_3, %c0_4, %c0_5] : memref<4x128x128xbf16, #tpu.memory_space<vmem>>, vector<1x128x128xbf16>
    %5 = vector.shape_cast %4 : vector<1x128x128xbf16> to vector<128x128xbf16>
    %6 = arith.truncf %2 : vector<8x128xf32> to vector<8x128xbf16>
    %cst = arith.constant dense<0.000000e+00> : vector<8x128xf32>
    %7 = tpu.matmul %6, %5, %cst {dimension_numbers = #tpu.dot_dimension_numbers<[1], [0], [0], [1], [0, 0, 1, 1], [], []>} : vector<8x128xbf16>, vector<128x128xbf16>, vector<8x128xf32> -> vector<8x128xf32>
    %c0_6 = arith.constant 0 : index
    %c0_7 = arith.constant 0 : index
    %c0_8 = arith.constant 0 : index
    %8 = vector.load %arg4[%c0_6, %c0_7, %c0_8] : memref<10x1x128xf32, #tpu.memory_space<vmem>>, vector<1x1x128xf32>
    %9 = vector.shape_cast %8 : vector<1x1x128xf32> to vector<1x128xf32>
    %10 = vector.broadcast %9 : vector<1x128xf32> to vector<8x128xf32>
    %11 = arith.addf %7, %10 : vector<8x128xf32>
    %cst_9 = arith.constant 0.000000e+00 : f32
    %12 = vector.broadcast %cst_9 : f32 to vector<8x128xf32>
    %13 = arith.maximumf %11, %12 : vector<8x128xf32>
    %c1 = arith.constant 1 : index
    %c0_10 = arith.constant 0 : index
    %c0_11 = arith.constant 0 : index
    %14 = vector.load %arg3[%c1, %c0_10, %c0_11] : memref<4x128x128xbf16, #tpu.memory_space<vmem>>, vector<1x128x128xbf16>
    %15 = vector.shape_cast %14 : vector<1x128x128xbf16> to vector<128x128xbf16>
    %16 = arith.truncf %13 : vector<8x128xf32> to vector<8x128xbf16>
    %cst_12 = arith.constant dense<0.000000e+00> : vector<8x128xf32>
    %17 = tpu.matmul %16, %15, %cst_12 {dimension_numbers = #tpu.dot_dimension_numbers<[1], [0], [0], [1], [0, 0, 1, 1], [], []>} : vector<8x128xbf16>, vector<128x128xbf16>, vector<8x128xf32> -> vector<8x128xf32>
    %c1_13 = arith.constant 1 : index
    %c0_14 = arith.constant 0 : index
    %c0_15 = arith.constant 0 : index
    %18 = vector.load %arg4[%c1_13, %c0_14, %c0_15] : memref<10x1x128xf32, #tpu.memory_space<vmem>>, vector<1x1x128xf32>
    %19 = vector.shape_cast %18 : vector<1x1x128xf32> to vector<1x128xf32>
    %20 = vector.broadcast %19 : vector<1x128xf32> to vector<8x128xf32>
    %21 = arith.addf %17, %20 : vector<8x128xf32>
    %cst_16 = arith.constant 0.000000e+00 : f32
    %22 = vector.broadcast %cst_16 : f32 to vector<8x128xf32>
    %23 = arith.maximumf %21, %22 : vector<8x128xf32>
    %c2 = arith.constant 2 : index
    %c0_17 = arith.constant 0 : index
    %c0_18 = arith.constant 0 : index
    %24 = vector.load %arg3[%c2, %c0_17, %c0_18] : memref<4x128x128xbf16, #tpu.memory_space<vmem>>, vector<1x128x128xbf16>
    %25 = vector.shape_cast %24 : vector<1x128x128xbf16> to vector<128x128xbf16>
    %26 = arith.truncf %23 : vector<8x128xf32> to vector<8x128xbf16>
    %cst_19 = arith.constant dense<0.000000e+00> : vector<8x128xf32>
    %27 = tpu.matmul %26, %25, %cst_19 {dimension_numbers = #tpu.dot_dimension_numbers<[1], [0], [0], [1], [0, 0, 1, 1], [], []>} : vector<8x128xbf16>, vector<128x128xbf16>, vector<8x128xf32> -> vector<8x128xf32>
    %c2_20 = arith.constant 2 : index
    %c0_21 = arith.constant 0 : index
    %c0_22 = arith.constant 0 : index
    %28 = vector.load %arg4[%c2_20, %c0_21, %c0_22] : memref<10x1x128xf32, #tpu.memory_space<vmem>>, vector<1x1x128xf32>
    %29 = vector.shape_cast %28 : vector<1x1x128xf32> to vector<1x128xf32>
    %30 = vector.broadcast %29 : vector<1x128xf32> to vector<8x128xf32>
    %31 = arith.addf %27, %30 : vector<8x128xf32>
    %c3 = arith.constant 3 : index
    %c0_23 = arith.constant 0 : index
    %c0_24 = arith.constant 0 : index
    %32 = vector.load %arg3[%c3, %c0_23, %c0_24] : memref<4x128x128xbf16, #tpu.memory_space<vmem>>, vector<1x128x128xbf16>
    %33 = vector.shape_cast %32 : vector<1x128x128xbf16> to vector<128x128xbf16>
    %34 = arith.truncf %31 : vector<8x128xf32> to vector<8x128xbf16>
    %cst_25 = arith.constant dense<0.000000e+00> : vector<8x128xf32>
    %35 = tpu.matmul %34, %33, %cst_25 {dimension_numbers = #tpu.dot_dimension_numbers<[1], [0], [0], [1], [0, 0, 1, 1], [], []>} : vector<8x128xbf16>, vector<128x128xbf16>, vector<8x128xf32> -> vector<8x128xf32>
    %c3_26 = arith.constant 3 : index
    %c0_27 = arith.constant 0 : index
    %c0_28 = arith.constant 0 : index
    %36 = vector.load %arg4[%c3_26, %c0_27, %c0_28] : memref<10x1x128xf32, #tpu.memory_space<vmem>>, vector<1x1x128xf32>
    %37 = vector.shape_cast %36 : vector<1x1x128xf32> to vector<1x128xf32>
    %38 = vector.broadcast %37 : vector<1x128xf32> to vector<8x128xf32>
    %39 = arith.addf %35, %38 : vector<8x128xf32>
    %40 = tpu.iota {dimensions = array<i32: 1>} : vector<1x128xi32>
    %c64_i32 = arith.constant 64 : i32
    %41 = vector.broadcast %c64_i32 : i32 to vector<1x128xi32>
    %42 = arith.cmpi slt, %40, %41 : vector<1x128xi32>
    %c64_i32_29 = arith.constant 64 : i32
    %43 = tpu.dynamic_rotate %39 by %c64_i32_29 dim 1 : vector<8x128xf32>, i32 -> vector<8x128xf32>
    %cst_30 = arith.constant 0.000000e+00 : f32
    %44 = vector.shape_cast %42 : vector<1x128xi1> to vector<1x128xi1>
    %45 = vector.broadcast %44 : vector<1x128xi1> to vector<8x128xi1>
    %46 = vector.broadcast %cst_30 : f32 to vector<8x128xf32>
    %47 = arith.select %45, %43, %46 : vector<8x128xi1>, vector<8x128xf32>
    %cst_31 = arith.constant 5.000000e-01 : f32
    %48 = vector.broadcast %cst_31 : f32 to vector<8x128xf32>
    %49 = arith.mulf %48, %47 : vector<8x128xf32>
    %50 = math.exp %49 : vector<8x128xf32>
    %cst_32 = arith.constant 1.000000e-07 : f32
    %51 = vector.broadcast %cst_32 : f32 to vector<8x128xf32>
    %52 = arith.addf %50, %51 : vector<8x128xf32>
    %53 = arith.mulf %3, %52 : vector<8x128xf32>
    %54 = arith.addf %39, %53 : vector<8x128xf32>
    %c0_i32_33 = arith.constant 0 : i32
    %55 = tpu.memref_slice %arg8[%c0_i32_33] : memref<1x!tpu.dma_semaphore, #tpu.memory_space<semaphore_mem>> -> memref<1x!tpu.dma_semaphore, #tpu.memory_space<semaphore_mem>>
    %56 = tpu.memref_squeeze %55 : memref<1x!tpu.dma_semaphore, #tpu.memory_space<semaphore_mem>> -> memref<!tpu.dma_semaphore, #tpu.memory_space<semaphore_mem>>
    tpu.wait_dma2 semaphore(%56 : memref<!tpu.dma_semaphore, #tpu.memory_space<semaphore_mem>>) src(%arg5 : memref<6x128x128xbf16, #tpu.memory_space<any>>) dst(%arg7 : memref<6x128x128xbf16, #tpu.memory_space<vmem>>)
    %c0_34 = arith.constant 0 : index
    %c0_35 = arith.constant 0 : index
    %c0_36 = arith.constant 0 : index
    %57 = vector.load %arg7[%c0_34, %c0_35, %c0_36] : memref<6x128x128xbf16, #tpu.memory_space<vmem>>, vector<1x128x128xbf16>
    %58 = vector.shape_cast %57 : vector<1x128x128xbf16> to vector<128x128xbf16>
    %59 = arith.truncf %54 : vector<8x128xf32> to vector<8x128xbf16>
    %cst_37 = arith.constant dense<0.000000e+00> : vector<8x128xf32>
    %60 = tpu.matmul %59, %58, %cst_37 {dimension_numbers = #tpu.dot_dimension_numbers<[1], [0], [0], [1], [0, 0, 1, 1], [], []>} : vector<8x128xbf16>, vector<128x128xbf16>, vector<8x128xf32> -> vector<8x128xf32>
    %c4 = arith.constant 4 : index
    %c0_38 = arith.constant 0 : index
    %c0_39 = arith.constant 0 : index
    %61 = vector.load %arg4[%c4, %c0_38, %c0_39] : memref<10x1x128xf32, #tpu.memory_space<vmem>>, vector<1x1x128xf32>
    %62 = vector.shape_cast %61 : vector<1x1x128xf32> to vector<1x128xf32>
    %63 = vector.broadcast %62 : vector<1x128xf32> to vector<8x128xf32>
    %64 = arith.addf %60, %63 : vector<8x128xf32>
    %cst_40 = arith.constant 0.000000e+00 : f32
    %65 = vector.broadcast %cst_40 : f32 to vector<8x128xf32>
    %66 = arith.maximumf %64, %65 : vector<8x128xf32>
    %c1_41 = arith.constant 1 : index
    %c0_42 = arith.constant 0 : index
    %c0_43 = arith.constant 0 : index
    %67 = vector.load %arg7[%c1_41, %c0_42, %c0_43] : memref<6x128x128xbf16, #tpu.memory_space<vmem>>, vector<1x128x128xbf16>
    %68 = vector.shape_cast %67 : vector<1x128x128xbf16> to vector<128x128xbf16>
    %69 = arith.truncf %66 : vector<8x128xf32> to vector<8x128xbf16>
    %cst_44 = arith.constant dense<0.000000e+00> : vector<8x128xf32>
    %70 = tpu.matmul %69, %68, %cst_44 {dimension_numbers = #tpu.dot_dimension_numbers<[1], [0], [0], [1], [0, 0, 1, 1], [], []>} : vector<8x128xbf16>, vector<128x128xbf16>, vector<8x128xf32> -> vector<8x128xf32>
    %c5 = arith.constant 5 : index
    %c0_45 = arith.constant 0 : index
    %c0_46 = arith.constant 0 : index
    %71 = vector.load %arg4[%c5, %c0_45, %c0_46] : memref<10x1x128xf32, #tpu.memory_space<vmem>>, vector<1x1x128xf32>
    %72 = vector.shape_cast %71 : vector<1x1x128xf32> to vector<1x128xf32>
    %73 = vector.broadcast %72 : vector<1x128xf32> to vector<8x128xf32>
    %74 = arith.addf %70, %73 : vector<8x128xf32>
    %cst_47 = arith.constant 0.000000e+00 : f32
    %75 = vector.broadcast %cst_47 : f32 to vector<8x128xf32>
    %76 = arith.maximumf %74, %75 : vector<8x128xf32>
    %c2_48 = arith.constant 2 : index
    %c0_49 = arith.constant 0 : index
    %c0_50 = arith.constant 0 : index
    %77 = vector.load %arg7[%c2_48, %c0_49, %c0_50] : memref<6x128x128xbf16, #tpu.memory_space<vmem>>, vector<1x128x128xbf16>
    %78 = vector.shape_cast %77 : vector<1x128x128xbf16> to vector<128x128xbf16>
    %79 = arith.truncf %76 : vector<8x128xf32> to vector<8x128xbf16>
    %cst_51 = arith.constant dense<0.000000e+00> : vector<8x128xf32>
    %80 = tpu.matmul %79, %78, %cst_51 {dimension_numbers = #tpu.dot_dimension_numbers<[1], [0], [0], [1], [0, 0, 1, 1], [], []>} : vector<8x128xbf16>, vector<128x128xbf16>, vector<8x128xf32> -> vector<8x128xf32>
    %c6 = arith.constant 6 : index
    %c0_52 = arith.constant 0 : index
    %c0_53 = arith.constant 0 : index
    %81 = vector.load %arg4[%c6, %c0_52, %c0_53] : memref<10x1x128xf32, #tpu.memory_space<vmem>>, vector<1x1x128xf32>
    %82 = vector.shape_cast %81 : vector<1x1x128xf32> to vector<1x128xf32>
    %83 = vector.broadcast %82 : vector<1x128xf32> to vector<8x128xf32>
    %84 = arith.addf %80, %83 : vector<8x128xf32>
    %85 = arith.addf %39, %84 : vector<8x128xf32>
    %86 = arith.addf %54, %84 : vector<8x128xf32>
    %c3_54 = arith.constant 3 : index
    %c0_55 = arith.constant 0 : index
    %c0_56 = arith.constant 0 : index
    %87 = vector.load %arg7[%c3_54, %c0_55, %c0_56] : memref<6x128x128xbf16, #tpu.memory_space<vmem>>, vector<1x128x128xbf16>
    %88 = vector.shape_cast %87 : vector<1x128x128xbf16> to vector<128x128xbf16>
    %89 = arith.truncf %86 : vector<8x128xf32> to vector<8x128xbf16>
    %cst_57 = arith.constant dense<0.000000e+00> : vector<8x128xf32>
    %90 = tpu.matmul %89, %88, %cst_57 {dimension_numbers = #tpu.dot_dimension_numbers<[1], [0], [0], [1], [0, 0, 1, 1], [], []>} : vector<8x128xbf16>, vector<128x128xbf16>, vector<8x128xf32> -> vector<8x128xf32>
    %c7 = arith.constant 7 : index
    %c0_58 = arith.constant 0 : index
    %c0_59 = arith.constant 0 : index
    %91 = vector.load %arg4[%c7, %c0_58, %c0_59] : memref<10x1x128xf32, #tpu.memory_space<vmem>>, vector<1x1x128xf32>
    %92 = vector.shape_cast %91 : vector<1x1x128xf32> to vector<1x128xf32>
    %93 = vector.broadcast %92 : vector<1x128xf32> to vector<8x128xf32>
    %94 = arith.addf %90, %93 : vector<8x128xf32>
    %cst_60 = arith.constant 0.000000e+00 : f32
    %95 = vector.broadcast %cst_60 : f32 to vector<8x128xf32>
    %96 = arith.maximumf %94, %95 : vector<8x128xf32>
    %c4_61 = arith.constant 4 : index
    %c0_62 = arith.constant 0 : index
    %c0_63 = arith.constant 0 : index
    %97 = vector.load %arg7[%c4_61, %c0_62, %c0_63] : memref<6x128x128xbf16, #tpu.memory_space<vmem>>, vector<1x128x128xbf16>
    %98 = vector.shape_cast %97 : vector<1x128x128xbf16> to vector<128x128xbf16>
    %99 = arith.truncf %96 : vector<8x128xf32> to vector<8x128xbf16>
    %cst_64 = arith.constant dense<0.000000e+00> : vector<8x128xf32>
    %100 = tpu.matmul %99, %98, %cst_64 {dimension_numbers = #tpu.dot_dimension_numbers<[1], [0], [0], [1], [0, 0, 1, 1], [], []>} : vector<8x128xbf16>, vector<128x128xbf16>, vector<8x128xf32> -> vector<8x128xf32>
    %c8 = arith.constant 8 : index
    %c0_65 = arith.constant 0 : index
    %c0_66 = arith.constant 0 : index
    %101 = vector.load %arg4[%c8, %c0_65, %c0_66] : memref<10x1x128xf32, #tpu.memory_space<vmem>>, vector<1x1x128xf32>
    %102 = vector.shape_cast %101 : vector<1x1x128xf32> to vector<1x128xf32>
    %103 = vector.broadcast %102 : vector<1x128xf32> to vector<8x128xf32>
    %104 = arith.addf %100, %103 : vector<8x128xf32>
    %cst_67 = arith.constant 0.000000e+00 : f32
    %105 = vector.broadcast %cst_67 : f32 to vector<8x128xf32>
    %106 = arith.maximumf %104, %105 : vector<8x128xf32>
    %c5_68 = arith.constant 5 : index
    %c0_69 = arith.constant 0 : index
    %c0_70 = arith.constant 0 : index
    %107 = vector.load %arg7[%c5_68, %c0_69, %c0_70] : memref<6x128x128xbf16, #tpu.memory_space<vmem>>, vector<1x128x128xbf16>
    %108 = vector.shape_cast %107 : vector<1x128x128xbf16> to vector<128x128xbf16>
    %109 = arith.truncf %106 : vector<8x128xf32> to vector<8x128xbf16>
    %cst_71 = arith.constant dense<0.000000e+00> : vector<8x128xf32>
    %110 = tpu.matmul %109, %108, %cst_71 {dimension_numbers = #tpu.dot_dimension_numbers<[1], [0], [0], [1], [0, 0, 1, 1], [], []>} : vector<8x128xbf16>, vector<128x128xbf16>, vector<8x128xf32> -> vector<8x128xf32>
    %c9 = arith.constant 9 : index
    %c0_72 = arith.constant 0 : index
    %c0_73 = arith.constant 0 : index
    %111 = vector.load %arg4[%c9, %c0_72, %c0_73] : memref<10x1x128xf32, #tpu.memory_space<vmem>>, vector<1x1x128xf32>
    %112 = vector.shape_cast %111 : vector<1x1x128xf32> to vector<1x128xf32>
    %113 = vector.broadcast %112 : vector<1x128xf32> to vector<8x128xf32>
    %114 = arith.addf %110, %113 : vector<8x128xf32>
    %c0_74 = arith.constant 0 : index
    %c0_75 = arith.constant 0 : index
    %c0_76 = arith.constant 0 : index
    %115 = vector.load %arg6[%c0_74, %c0_75, %c0_76] : memref<3x8x128xf32, #tpu.memory_space<vmem>>, vector<1x8x128xf32>
    %116 = vector.shape_cast %115 : vector<1x8x128xf32> to vector<8x128xf32>
    %117 = vector.shape_cast %85 : vector<8x128xf32> to vector<1x8x128xf32>
    tpu.vector_store %arg6[%c0_74, %c0_75, %c0_76], %117 {strides = array<i32>} : memref<3x8x128xf32, #tpu.memory_space<vmem>>, vector<1x8x128xf32>,
    %c1_77 = arith.constant 1 : index
    %c0_78 = arith.constant 0 : index
    %c0_79 = arith.constant 0 : index
    %118 = vector.load %arg6[%c1_77, %c0_78, %c0_79] : memref<3x8x128xf32, #tpu.memory_space<vmem>>, vector<1x8x128xf32>
    %119 = vector.shape_cast %118 : vector<1x8x128xf32> to vector<8x128xf32>
    %120 = vector.shape_cast %86 : vector<8x128xf32> to vector<1x8x128xf32>
    tpu.vector_store %arg6[%c1_77, %c0_78, %c0_79], %120 {strides = array<i32>} : memref<3x8x128xf32, #tpu.memory_space<vmem>>, vector<1x8x128xf32>,
    %c2_80 = arith.constant 2 : index
    %c0_81 = arith.constant 0 : index
    %c0_82 = arith.constant 0 : index
    %121 = vector.load %arg6[%c2_80, %c0_81, %c0_82] : memref<3x8x128xf32, #tpu.memory_space<vmem>>, vector<1x8x128xf32>
    %122 = vector.shape_cast %121 : vector<1x8x128xf32> to vector<8x128xf32>
    %123 = vector.shape_cast %114 : vector<8x128xf32> to vector<1x8x128xf32>
    tpu.vector_store %arg6[%c2_80, %c0_81, %c0_82], %123 {strides = array<i32>} : memref<3x8x128xf32, #tpu.memory_space<vmem>>, vector<1x8x128xf32>,
    return
  }
  func.func @transform_0(%arg0: i32) -> (i32, i32) {
    %c0_i32 = arith.constant 0 : i32
    %c0_i32_0 = arith.constant 0 : i32
    return %arg0, %c0_i32 : i32, i32
  }
  func.func @transform_1(%arg0: i32) -> (i32, i32) {
    %c0_i32 = arith.constant 0 : i32
    %c0_i32_0 = arith.constant 0 : i32
    return %arg0, %c0_i32 : i32, i32
  }
  func.func @transform_2(%arg0: i32) -> (i32, i32, i32) {
    %c0_i32 = arith.constant 0 : i32
    %c0_i32_0 = arith.constant 0 : i32
    %c0_i32_1 = arith.constant 0 : i32
    %c0_i32_2 = arith.constant 0 : i32
    return %c0_i32, %c0_i32_0, %c0_i32_1 : i32, i32, i32
  }
  func.func @transform_3(%arg0: i32) -> (i32, i32, i32) {
    %c0_i32 = arith.constant 0 : i32
    %c0_i32_0 = arith.constant 0 : i32
    %c0_i32_1 = arith.constant 0 : i32
    %c0_i32_2 = arith.constant 0 : i32
    return %c0_i32, %c0_i32_0, %c0_i32_1 : i32, i32, i32
  }
  func.func @transform_5(%arg0: i32) -> (i32, i32, i32) {
    %c0_i32 = arith.constant 0 : i32
    %c0_i32_0 = arith.constant 0 : i32
    %c0_i32_1 = arith.constant 0 : i32
    return %c0_i32, %arg0, %c0_i32_0 : i32, i32, i32
  }
}

</mosaic_0001>

<llo_original>
// kernel: _lambda_.1
$region0: #{_lambda_.1}
  #allocation0 [shape = 'u32[]', space=smem, size = 0x4, offset = 0x4, fixed_abs, tag = 'smem constant byte address 0x4 - core index']
  #allocation1 [shape = 'u32[144,128]{1,0:T(1,128)}', space=vmem, size = 0x12000, scoped, tag = 'internal scratch']
  #allocation2 [shape = 'bf16[6,128,128]{2,1,0:T(16,128)(2,1)}', space=vmem, size = 0x30000, scoped, tag = 'scratch operand']
  #allocation3 [shape = 's32[1]{0}', space=sflag, size = 0x4, scoped, tag = 'scratch operand']
  #allocation6 [shape = 's32[]', space=sflag, size = 0x4, offset = 0, fixed_abs, tag = 'sflag constant byte address 0x0 - dummy sync flag']
  %s0 = inlined_call_operand.vmem [shape: f32[8,128], index: 0, kind: input, shape index: {}]
  %s1 = inlined_call_operand.vmem [shape: f32[8,128], index: 1, kind: input, shape index: {}]
  %s2 = inlined_call_operand.hbm [shape: bf16[4,128,128], index: 2, kind: input, shape index: {}]
  %s3 = inlined_call_operand.vmem [shape: f32[10,1,128], index: 3, kind: input, shape index: {}]
  %s4 = inlined_call_operand.vmem [shape: bf16[6,128,128], index: 4, kind: input, shape index: {}]
  %s5 = inlined_call_operand.vmem [shape: f32[3,8,128], index: 5, kind: output, shape index: {}]
  %s6 = sld [smem:[#allocation0]]
  $region64: #{_lambda_.1} parent=0
    _
  %s8 = ssub.s32 1, %s6
  %s9 = scalar_select 0, %s8, %s6
  $region1: #{_lambda_.1} parent=0
    #allocation4 [shape = 'u8[131072]{0}', space=vmem, size = 0x20000, scoped, tag = 'input window, operand 2, single buffered']
    #allocation5 [shape = 's32[1]{0}', space=sflag, size = 0x4, scoped, tag = 'scoped memory for _lambda_.1']
    %10 = vsyncpa [#allocation5], 0
    // Predicated region
    $region2: #{_lambda_.1} parent=1 // pred_check
      _
    $region3: #{_lambda_.1} parent=1 // pred_check_branch
      %12 = sbr.rel (0) target = $region5
    $region4: #{_lambda_.1} parent=1 // pred_region
      _
    $region5: #{_lambda_.1} parent=1 // pred_fallthru
      _
    // Predicated region
    $region6: #{_lambda_.1} parent=1 // pred_check
      _
    $region7: #{_lambda_.1} parent=1 // pred_check_branch
      %14 = sbr.rel (0) target = $region9
    $region8: #{_lambda_.1} parent=1 // pred_region
      _
    $region9: #{_lambda_.1} parent=1 // pred_fallthru
      _
    // Predicated region
    $region10: #{_lambda_.1} parent=1 // pred_check
      _
    $region11: #{_lambda_.1} parent=1 // pred_check_branch
      %16 = sbr.rel (0) target = $region13
    $region12: #{_lambda_.1} parent=1 // pred_region
      %s18 = ssub.s32 4096, 4096
      %19 = vsyncadd [#allocation5], %s18
      %s20 = sshll.u32 [#allocation4], 4
      %s21 = int_to_ptr.vmem [resolvable:$true] %s20
      %26 = dma.hbm_to_vmem [thread:$0]  %s2, 4096, %s21, [#allocation5], 64, 64, 4
    $region13: #{_lambda_.1} parent=1 // pred_fallthru
      _
    // Predicated region
    $region14: #{_lambda_.1} parent=1 // pred_check
      _
    $region15: #{_lambda_.1} parent=1 // pred_check_branch
      %28 = sbr.rel (0) target = $region17
    $region16: #{_lambda_.1} parent=1 // pred_region
      _
    $region17: #{_lambda_.1} parent=1 // pred_fallthru
      _
    // Predicated region
    $region18: #{_lambda_.1} parent=1 // pred_check
      _
    $region19: #{_lambda_.1} parent=1 // pred_check_branch
      %30 = sbr.rel (0) target = $region21
    $region20: #{_lambda_.1} parent=1 // pred_region
      %31 = dma.done [#allocation5], 4096
    $region21: #{_lambda_.1} parent=1 // pred_fallthru
      _
    %p34 = scmp.lt.u32.totalorder 384, 8
    %p35 = pneg %p34
    // Predicated region
    $region22: #{_lambda_.1} parent=1 // pred_check
      _
    $region23: #{_lambda_.1} parent=1 // pred_check_branch
      %37 = sbr.rel (%p34) target = $region25
    $region24: #{_lambda_.1} parent=1 // pred_region
      %s52 = sand.u32 384, 7
      %p53 = scmp.eq.s32.totalorder %s52, 0
      // Predicated region
      $region37: #{_lambda_.1} parent=24 // pred_check
        %p54 = pneg %p53
      $region38: #{_lambda_.1} parent=24 // pred_check_branch
        %56 = sbr.rel (%p54) target = $region40
      $region39: #{_lambda_.1} parent=24 // pred_region
        loop: start=0, step=1, limit=1
        $region41: #{_lambda_.1} parent=39 // loop_pre_header
          _
        $region42: #{_lambda_.1} parent=39 // loop_header
          %s58 = sphi 0, %s62
          %p59 = scmp.ge.s32.totalorder %s58, 1
          %s63 = sphi %s4, %s4
          %s64 = sphi [#allocation2], [#allocation2]
        $region43: #{_lambda_.1} parent=39 // loop_header_branch
          %61 = sbr.rel (%p59) target = $region47
        $region44: #{_lambda_.1} parent=39 // loop_body
          %v65 = vld [vmem:[%s63] sm:$0xff]
          %66 = vst [vmem:[%s64] sm:$0xff] %v65
          %v67 = vld [vmem:[%s63 + $0x8] sm:$0xff]
          %68 = vst [vmem:[%s64 + $0x8] sm:$0xff] %v67
          %v69 = vld [vmem:[%s63 + $0x10] sm:$0xff]
          %70 = vst [vmem:[%s64 + $0x10] sm:$0xff] %v69
          %v71 = vld [vmem:[%s63 + $0x18] sm:$0xff]
          %72 = vst [vmem:[%s64 + $0x18] sm:$0xff] %v71
          %v73 = vld [vmem:[%s63 + $0x20] sm:$0xff]
          %74 = vst [vmem:[%s64 + $0x20] sm:$0xff] %v73
          %v75 = vld [vmem:[%s63 + $0x28] sm:$0xff]
          %76 = vst [vmem:[%s64 + $0x28] sm:$0xff] %v75
          %v77 = vld [vmem:[%s63 + $0x30] sm:$0xff]
          %78 = vst [vmem:[%s64 + $0x30] sm:$0xff] %v77
          %v79 = vld [vmem:[%s63 + $0x38] sm:$0xff]
          %80 = vst [vmem:[%s64 + $0x38] sm:$0xff] %v79
          %v81 = vld [vmem:[%s63 + $0x40] sm:$0xff]
          %82 = vst [vmem:[%s64 + $0x40] sm:$0xff] %v81
          %v83 = vld [vmem:[%s63 + $0x48] sm:$0xff]
          %84 = vst [vmem:[%s64 + $0x48] sm:$0xff] %v83
          %v85 = vld [vmem:[%s63 + $0x50] sm:$0xff]
          %86 = vst [vmem:[%s64 + $0x50] sm:$0xff] %v85
          %v87 = vld [vmem:[%s63 + $0x58] sm:$0xff]
          %88 = vst [vmem:[%s64 + $0x58] sm:$0xff] %v87
          %v89 = vld [vmem:[%s63 + $0x60] sm:$0xff]
          %90 = vst [vmem:[%s64 + $0x60] sm:$0xff] %v89
          %v91 = vld [vmem:[%s63 + $0x68] sm:$0xff]
          %92 = vst [vmem:[%s64 + $0x68] sm:$0xff] %v91
          %v93 = vld [vmem:[%s63 + $0x70] sm:$0xff]
          %94 = vst [vmem:[%s64 + $0x70] sm:$0xff] %v93
          %v95 = vld [vmem:[%s63 + $0x78] sm:$0xff]
          %96 = vst [vmem:[%s64 + $0x78] sm:$0xff] %v95
          %v97 = vld [vmem:[%s63 + $0x80] sm:$0xff]
          %98 = vst [vmem:[%s64 + $0x80] sm:$0xff] %v97
          %v99 = vld [vmem:[%s63 + $0x88] sm:$0xff]
          %100 = vst [vmem:[%s64 + $0x88] sm:$0xff] %v99
          %v101 = vld [vmem:[%s63 + $0x90] sm:$0xff]
          %102 = vst [vmem:[%s64 + $0x90] sm:$0xff] %v101
          %v103 = vld [vmem:[%s63 + $0x98] sm:$0xff]
          %104 = vst [vmem:[%s64 + $0x98] sm:$0xff] %v103
          %v105 = vld [vmem:[%s63 + $0xa0] sm:$0xff]
          %106 = vst [vmem:[%s64 + $0xa0] sm:$0xff] %v105
          %v107 = vld [vmem:[%s63 + $0xa8] sm:$0xff]
          %108 = vst [vmem:[%s64 + $0xa8] sm:$0xff] %v107
          %v109 = vld [vmem:[%s63 + $0xb0] sm:$0xff]
          %110 = vst [vmem:[%s64 + $0xb0] sm:$0xff] %v109
          %v111 = vld [vmem:[%s63 + $0xb8] sm:$0xff]
          %112 = vst [vmem:[%s64 + $0xb8] sm:$0xff] %v111
          %v113 = vld [vmem:[%s63 + $0xc0] sm:$0xff]
          %114 = vst [vmem:[%s64 + $0xc0] sm:$0xff] %v113
          %v115 = vld [vmem:[%s63 + $0xc8] sm:$0xff]
          %116 = vst [vmem:[%s64 + $0xc8] sm:$0xff] %v115
          %v117 = vld [vmem:[%s63 + $0xd0] sm:$0xff]
          %118 = vst [vmem:[%s64 + $0xd0] sm:$0xff] %v117
          %v119 = vld [vmem:[%s63 + $0xd8] sm:$0xff]
          %120 = vst [vmem:[%s64 + $0xd8] sm:$0xff] %v119
          %v121 = vld [vmem:[%s63 + $0xe0] sm:$0xff]
          %122 = vst [vmem:[%s64 + $0xe0] sm:$0xff] %v121
          %v123 = vld [vmem:[%s63 + $0xe8] sm:$0xff]
          %124 = vst [vmem:[%s64 + $0xe8] sm:$0xff] %v123
          %v125 = vld [vmem:[%s63 + $0xf0] sm:$0xff]
          %126 = vst [vmem:[%s64 + $0xf0] sm:$0xff] %v125
          %v127 = vld [vmem:[%s63 + $0xf8] sm:$0xff]
          %128 = vst [vmem:[%s64 + $0xf8] sm:$0xff] %v127
          %v129 = vld [vmem:[%s63 + $0x100] sm:$0xff]
          %130 = vst [vmem:[%s64 + $0x100] sm:$0xff] %v129
          %v131 = vld [vmem:[%s63 + $0x108] sm:$0xff]
          %132 = vst [vmem:[%s64 + $0x108] sm:$0xff] %v131
          %v133 = vld [vmem:[%s63 + $0x110] sm:$0xff]
          %134 = vst [vmem:[%s64 + $0x110] sm:$0xff] %v133
          %v135 = vld [vmem:[%s63 + $0x118] sm:$0xff]
          %136 = vst [vmem:[%s64 + $0x118] sm:$0xff] %v135
          %v137 = vld [vmem:[%s63 + $0x120] sm:$0xff]
          %138 = vst [vmem:[%s64 + $0x120] sm:$0xff] %v137
          %v139 = vld [vmem:[%s63 + $0x128] sm:$0xff]
          %140 = vst [vmem:[%s64 + $0x128] sm:$0xff] %v139
          %v141 = vld [vmem:[%s63 + $0x130] sm:$0xff]
          %142 = vst [vmem:[%s64 + $0x130] sm:$0xff] %v141
          %v143 = vld [vmem:[%s63 + $0x138] sm:$0xff]
          %144 = vst [vmem:[%s64 + $0x138] sm:$0xff] %v143
          %v145 = vld [vmem:[%s63 + $0x140] sm:$0xff]
          %146 = vst [vmem:[%s64 + $0x140] sm:$0xff] %v145
          %v147 = vld [vmem:[%s63 + $0x148] sm:$0xff]
          %148 = vst [vmem:[%s64 + $0x148] sm:$0xff] %v147
          %v149 = vld [vmem:[%s63 + $0x150] sm:$0xff]
          %150 = vst [vmem:[%s64 + $0x150] sm:$0xff] %v149
          %v151 = vld [vmem:[%s63 + $0x158] sm:$0xff]
          %152 = vst [vmem:[%s64 + $0x158] sm:$0xff] %v151
          %v153 = vld [vmem:[%s63 + $0x160] sm:$0xff]
          %154 = vst [vmem:[%s64 + $0x160] sm:$0xff] %v153
          %v155 = vld [vmem:[%s63 + $0x168] sm:$0xff]
          %156 = vst [vmem:[%s64 + $0x168] sm:$0xff] %v155
          %v157 = vld [vmem:[%s63 + $0x170] sm:$0xff]
          %158 = vst [vmem:[%s64 + $0x170] sm:$0xff] %v157
          %v159 = vld [vmem:[%s63 + $0x178] sm:$0xff]
          %160 = vst [vmem:[%s64 + $0x178] sm:$0xff] %v159
        $region45: #{_lambda_.1} parent=39 // loop_footer
          %s62 = sadd.s32 1, %s58
        $region46: #{_lambda_.1} parent=39 // loop_footer_branch
          %57 = sbr.rel target = $region42
        $region47: #{_lambda_.1} parent=39 // loop_exit
          _
      $region40: #{_lambda_.1} parent=24 // pred_fallthru
        _
      %p161 = pneg %p53
      // Predicated region
      $region48: #{_lambda_.1} parent=24 // pred_check
        _
      $region49: #{_lambda_.1} parent=24 // pred_check_branch
        %163 = sbr.rel (%p53) target = $region51
      $region50: #{_lambda_.1} parent=24 // pred_region
        %s164 = sand.u32 384, 7
      $region51: #{_lambda_.1} parent=24 // pred_fallthru
        _
    $region25: #{_lambda_.1} parent=1 // pred_fallthru
      _
    // Predicated region
    $region26: #{_lambda_.1} parent=1 // pred_check
      %p38 = pneg %p34
    $region27: #{_lambda_.1} parent=1 // pred_check_branch
      %40 = sbr.rel (%p38) target = $region29
    $region28: #{_lambda_.1} parent=1 // pred_region
      %s41 = sshllo.u32 0, 384
      loop: start=0, step=1, limit=1
      $region30: #{_lambda_.1} parent=28 // loop_pre_header
        _
      $region31: #{_lambda_.1} parent=28 // loop_header
        %s43 = sphi 0, %s47
        %p44 = scmp.ge.s32.totalorder %s43, 1
        %s48 = sphi %s4, %s4
        %s49 = sphi [#allocation2], [#allocation2]
      $region32: #{_lambda_.1} parent=28 // loop_header_branch
        %46 = sbr.rel (%p44) target = $region36
      $region33: #{_lambda_.1} parent=28 // loop_body
        %v50 = vld [vmem:[%s48] sm:%s41]
        %51 = vst [vmem:[%s49] sm:%s41] %v50
      $region34: #{_lambda_.1} parent=28 // loop_footer
        %s47 = sadd.s32 1, %s43
      $region35: #{_lambda_.1} parent=28 // loop_footer_branch
        %42 = sbr.rel target = $region31
      $region36: #{_lambda_.1} parent=28 // loop_exit
        _
    $region29: #{_lambda_.1} parent=1 // pred_fallthru
      _
    // Predicated region
    $region52: #{_lambda_.1} parent=1 // pred_check
      _
    $region53: #{_lambda_.1} parent=1 // pred_check_branch
      %167 = sbr.rel (0) target = $region55
    $region54: #{_lambda_.1} parent=1 // pred_region
      %168 = vsyncadd [#allocation3], 6144
    $region55: #{_lambda_.1} parent=1 // pred_fallthru
      _
    %v169 = vld [vmem:[%s0] sm:$0xff]
    %v170 = vld [vmem:[%s1] sm:$0xff]
    %v171 = vld [vmem:[#allocation4] sm:$0xf]
    %v172 = vld [vmem:[#allocation4 + $0x4] sm:$0xf]
    %v173 = vld [vmem:[#allocation4 + $0x8] sm:$0xf]
    %v174 = vld [vmem:[#allocation4 + $0xc] sm:$0xf]
    %v175 = vld [vmem:[#allocation4 + $0x10] sm:$0xf]
    %v176 = vld [vmem:[#allocation4 + $0x14] sm:$0xf]
    %v177 = vld [vmem:[#allocation4 + $0x18] sm:$0xf]
    %v178 = vld [vmem:[#allocation4 + $0x1c] sm:$0xf]
    %v179 = vld [vmem:[#allocation4 + $0x20] sm:$0xf]
    %v180 = vld [vmem:[#allocation4 + $0x24] sm:$0xf]
    %v181 = vld [vmem:[#allocation4 + $0x28] sm:$0xf]
    %v182 = vld [vmem:[#allocation4 + $0x2c] sm:$0xf]
    %v183 = vld [vmem:[#allocation4 + $0x30] sm:$0xf]
    %v184 = vld [vmem:[#allocation4 + $0x34] sm:$0xf]
    %v185 = vld [vmem:[#allocation4 + $0x38] sm:$0xf]
    %v186 = vld [vmem:[#allocation4 + $0x3c] sm:$0xf]
    %v187 = vpack.c.bf16 %v169, %v169
    %v188 = vld [vmem:[%s3] sm:$0x1]
    %v190 = vlaneseq
    %v191 = vshrl.u32 %v190, 7
    %v192 = vsub.s32 0, %v191
    %v193 = vrot.slane %v188, %v192
    %v211 = vunpack.c.l.b16 %v171
    %v212 = vunpack.c.l.b16 %v172
    %v213 = vunpack.c.l.b16 %v173
    %v214 = vunpack.c.l.b16 %v174
    %v215 = vunpack.c.l.b16 %v175
    %v216 = vunpack.c.l.b16 %v176
    %v217 = vunpack.c.l.b16 %v177
    %v218 = vunpack.c.l.b16 %v178
    %v219 = vunpack.c.l.b16 %v179
    %v220 = vunpack.c.l.b16 %v180
    %v221 = vunpack.c.l.b16 %v181
    %v222 = vunpack.c.l.b16 %v182
    %v223 = vunpack.c.l.b16 %v183
    %v224 = vunpack.c.l.b16 %v184
    %v225 = vunpack.c.l.b16 %v185
    %v226 = vunpack.c.l.b16 %v186
    %v227 = vpack.c.b16 %v212, %v211
    %v228 = vpack.c.b16 %v214, %v213
    %v229 = vpack.c.b16 %v216, %v215
    %v230 = vpack.c.b16 %v218, %v217
    %v231 = vpack.c.b16 %v220, %v219
    %v232 = vpack.c.b16 %v222, %v221
    %v233 = vpack.c.b16 %v224, %v223
    %v234 = vpack.c.b16 %v226, %v225
    %243 = vmatprep.subr.bf16.mxu0 0
    %244 = vmatpush1.bf16.msra.mxu0 %v227
    %245 = vmatprep.subr.bf16.mxu0 0
    %246 = vmatpush1.bf16.msra.mxu0 %v228
    %247 = vmatprep.subr.bf16.mxu0 0
    %248 = vmatpush1.bf16.msra.mxu0 %v229
    %249 = vmatprep.subr.bf16.mxu0 0
    %250 = vmatpush1.bf16.msra.mxu0 %v230
    %251 = vmatprep.subr.bf16.mxu0 0
    %252 = vmatpush1.bf16.msra.mxu0 %v231
    %253 = vmatprep.subr.bf16.mxu0 0
    %254 = vmatpush1.bf16.msra.mxu0 %v232
    %255 = vmatprep.subr.bf16.mxu0 0
    %256 = vmatpush1.bf16.msra.mxu0 %v233
    %257 = vmatprep.subr.bf16.mxu0 0
    %258 = vmatpush1.bf16.msra.mxu0 %v234
    %259 = vmatprep.subr.bf16.mxu0 0
    %260 = vmatpush1.bf16.msra.mxu0 0
    %261 = vmatprep.subr.bf16.mxu0 0
    %262 = vmatpush1.bf16.msra.mxu0 0
    %263 = vmatprep.subr.bf16.mxu0 0
    %264 = vmatpush1.bf16.msra.mxu0 0
    %265 = vmatprep.subr.bf16.mxu0 0
    %266 = vmatpush1.bf16.msra.mxu0 0
    %267 = vmatprep.subr.bf16.mxu0 0
    %268 = vmatpush1.bf16.msra.mxu0 0
    %269 = vmatprep.subr.bf16.mxu0 0
    %270 = vmatpush1.bf16.msra.mxu0 0
    %271 = vmatprep.subr.bf16.mxu0 0
    %272 = vmatpush1.bf16.msra.mxu0 0
    %273 = vmatprep.subr.bf16.mxu0 0
    %274 = vmatpush1.bf16.msra.mxu0 0
    %275 = vmatprep.mubr.bf16.mxu0 0
    %276 = vmatmul.mubr.bf16.gmra.mrb[0].mxu0 %v187
    %v277 = vpop.f32.mrb[0].mxu0
    %v278 = vadd.f32 %v193, %v277
    %v279 = vpop.f32.mrb[0].mxu0
    %v280 = vpop.f32.mrb[0].mxu0
    %v281 = vpop.f32.mrb[0].mxu0
    %282 = vdwg.mxu0
    %v283 = vmax.f32 %v278, 0.0
    %s284 = scalar_lea.vmem [#allocation4], 64
    %v285 = vld [vmem:[%s284] sm:$0xf]
    %v286 = vld [vmem:[%s284 + $0x4] sm:$0xf]
    %v287 = vld [vmem:[%s284 + $0x8] sm:$0xf]
    %v288 = vld [vmem:[%s284 + $0xc] sm:$0xf]
    %v289 = vld [vmem:[%s284 + $0x10] sm:$0xf]
    %v290 = vld [vmem:[%s284 + $0x14] sm:$0xf]
    %v291 = vld [vmem:[%s284 + $0x18] sm:$0xf]
    %v292 = vld [vmem:[%s284 + $0x1c] sm:$0xf]
    %v293 = vld [vmem:[%s284 + $0x20] sm:$0xf]
    %v294 = vld [vmem:[%s284 + $0x24] sm:$0xf]
    %v295 = vld [vmem:[%s284 + $0x28] sm:$0xf]
    %v296 = vld [vmem:[%s284 + $0x2c] sm:$0xf]
    %v297 = vld [vmem:[%s284 + $0x30] sm:$0xf]
    %v298 = vld [vmem:[%s284 + $0x34] sm:$0xf]
    %v299 = vld [vmem:[%s284 + $0x38] sm:$0xf]
    %v300 = vld [vmem:[%s284 + $0x3c] sm:$0xf]
    %v301 = vpack.c.bf16 %v283, %v283
    %s302 = scalar_lea.vmem %s3, 1
    %v303 = vld [vmem:[%s302] sm:$0x1]
    %v305 = vlaneseq
    %v306 = vshrl.u32 %v305, 7
    %v307 = vsub.s32 0, %v306
    %v308 = vrot.slane %v303, %v307
    %v326 = vunpack.c.l.b16 %v285
    %v327 = vunpack.c.l.b16 %v286
    %v328 = vunpack.c.l.b16 %v287
    %v329 = vunpack.c.l.b16 %v288
    %v330 = vunpack.c.l.b16 %v289
    %v331 = vunpack.c.l.b16 %v290
    %v332 = vunpack.c.l.b16 %v291
    %v333 = vunpack.c.l.b16 %v292
    %v334 = vunpack.c.l.b16 %v293
    %v335 = vunpack.c.l.b16 %v294
    %v336 = vunpack.c.l.b16 %v295
    %v337 = vunpack.c.l.b16 %v296
    %v338 = vunpack.c.l.b16 %v297
    %v339 = vunpack.c.l.b16 %v298
    %v340 = vunpack.c.l.b16 %v299
    %v341 = vunpack.c.l.b16 %v300
    %v342 = vpack.c.b16 %v327, %v326
    %v343 = vpack.c.b16 %v329, %v328
    %v344 = vpack.c.b16 %v331, %v330
    %v345 = vpack.c.b16 %v333, %v332
    %v346 = vpack.c.b16 %v335, %v334
    %v347 = vpack.c.b16 %v337, %v336
    %v348 = vpack.c.b16 %v339, %v338
    %v349 = vpack.c.b16 %v341, %v340
    %358 = vmatprep.subr.bf16.mxu0 0
    %359 = vmatpush1.bf16.msra.mxu0 %v342
    %360 = vmatprep.subr.bf16.mxu0 0
    %361 = vmatpush1.bf16.msra.mxu0 %v343
    %362 = vmatprep.subr.bf16.mxu0 0
    %363 = vmatpush1.bf16.msra.mxu0 %v344
    %364 = vmatprep.subr.bf16.mxu0 0
    %365 = vmatpush1.bf16.msra.mxu0 %v345
    %366 = vmatprep.subr.bf16.mxu0 0
    %367 = vmatpush1.bf16.msra.mxu0 %v346
    %368 = vmatprep.subr.bf16.mxu0 0
    %369 = vmatpush1.bf16.msra.mxu0 %v347
    %370 = vmatprep.subr.bf16.mxu0 0
    %371 = vmatpush1.bf16.msra.mxu0 %v348
    %372 = vmatprep.subr.bf16.mxu0 0
    %373 = vmatpush1.bf16.msra.mxu0 %v349
    %374 = vmatprep.subr.bf16.mxu0 0
    %375 = vmatpush1.bf16.msra.mxu0 0
    %376 = vmatprep.subr.bf16.mxu0 0
    %377 = vmatpush1.bf16.msra.mxu0 0
    %378 = vmatprep.subr.bf16.mxu0 0
    %379 = vmatpush1.bf16.msra.mxu0 0
    %380 = vmatprep.subr.bf16.mxu0 0
    %381 = vmatpush1.bf16.msra.mxu0 0
    %382 = vmatprep.subr.bf16.mxu0 0
    %383 = vmatpush1.bf16.msra.mxu0 0
    %384 = vmatprep.subr.bf16.mxu0 0
    %385 = vmatpush1.bf16.msra.mxu0 0
    %386 = vmatprep.subr.bf16.mxu0 0
    %387 = vmatpush1.bf16.msra.mxu0 0
    %388 = vmatprep.subr.bf16.mxu0 0
    %389 = vmatpush1.bf16.msra.mxu0 0
    %390 = vmatprep.mubr.bf16.mxu0 0
    %391 = vmatmul.mubr.bf16.gmra.mrb[0].mxu0 %v301
    %v392 = vpop.f32.mrb[0].mxu0
    %v393 = vadd.f32 %v308, %v392
    %v394 = vpop.f32.mrb[0].mxu0
    %v395 = vpop.f32.mrb[0].mxu0
    %v396 = vpop.f32.mrb[0].mxu0
    %397 = vdwg.mxu0
    %v398 = vmax.f32 %v393, 0.0
    %s399 = scalar_lea.vmem [#allocation4], 128
    %v400 = vld [vmem:[%s399] sm:$0xf]
    %v401 = vld [vmem:[%s399 + $0x4] sm:$0xf]
    %v402 = vld [vmem:[%s399 + $0x8] sm:$0xf]
    %v403 = vld [vmem:[%s399 + $0xc] sm:$0xf]
    %v404 = vld [vmem:[%s399 + $0x10] sm:$0xf]
    %v405 = vld [vmem:[%s399 + $0x14] sm:$0xf]
    %v406 = vld [vmem:[%s399 + $0x18] sm:$0xf]
    %v407 = vld [vmem:[%s399 + $0x1c] sm:$0xf]
    %v408 = vld [vmem:[%s399 + $0x20] sm:$0xf]
    %v409 = vld [vmem:[%s399 + $0x24] sm:$0xf]
    %v410 = vld [vmem:[%s399 + $0x28] sm:$0xf]
    %v411 = vld [vmem:[%s399 + $0x2c] sm:$0xf]
    %v412 = vld [vmem:[%s399 + $0x30] sm:$0xf]
    %v413 = vld [vmem:[%s399 + $0x34] sm:$0xf]
    %v414 = vld [vmem:[%s399 + $0x38] sm:$0xf]
    %v415 = vld [vmem:[%s399 + $0x3c] sm:$0xf]
    %v416 = vpack.c.bf16 %v398, %v398
    %s417 = scalar_lea.vmem %s3, 2
    %v418 = vld [vmem:[%s417] sm:$0x1]
    %v420 = vlaneseq
    %v421 = vshrl.u32 %v420, 7
    %v422 = vsub.s32 0, %v421
    %v423 = vrot.slane %v418, %v422
    %v441 = vunpack.c.l.b16 %v400
    %v442 = vunpack.c.l.b16 %v401
    %v443 = vunpack.c.l.b16 %v402
    %v444 = vunpack.c.l.b16 %v403
    %v445 = vunpack.c.l.b16 %v404
    %v446 = vunpack.c.l.b16 %v405
    %v447 = vunpack.c.l.b16 %v406
    %v448 = vunpack.c.l.b16 %v407
    %v449 = vunpack.c.l.b16 %v408
    %v450 = vunpack.c.l.b16 %v409
    %v451 = vunpack.c.l.b16 %v410
    %v452 = vunpack.c.l.b16 %v411
    %v453 = vunpack.c.l.b16 %v412
    %v454 = vunpack.c.l.b16 %v413
    %v455 = vunpack.c.l.b16 %v414
    %v456 = vunpack.c.l.b16 %v415
    %v457 = vpack.c.b16 %v442, %v441
    %v458 = vpack.c.b16 %v444, %v443
    %v459 = vpack.c.b16 %v446, %v445
    %v460 = vpack.c.b16 %v448, %v447
    %v461 = vpack.c.b16 %v450, %v449
    %v462 = vpack.c.b16 %v452, %v451
    %v463 = vpack.c.b16 %v454, %v453
    %v464 = vpack.c.b16 %v456, %v455
    %473 = vmatprep.subr.bf16.mxu0 0
    %474 = vmatpush1.bf16.msra.mxu0 %v457
    %475 = vmatprep.subr.bf16.mxu0 0
    %476 = vmatpush1.bf16.msra.mxu0 %v458
    %477 = vmatprep.subr.bf16.mxu0 0
    %478 = vmatpush1.bf16.msra.mxu0 %v459
    %479 = vmatprep.subr.bf16.mxu0 0
    %480 = vmatpush1.bf16.msra.mxu0 %v460
    %481 = vmatprep.subr.bf16.mxu0 0
    %482 = vmatpush1.bf16.msra.mxu0 %v461
    %483 = vmatprep.subr.bf16.mxu0 0
    %484 = vmatpush1.bf16.msra.mxu0 %v462
    %485 = vmatprep.subr.bf16.mxu0 0
    %486 = vmatpush1.bf16.msra.mxu0 %v463
    %487 = vmatprep.subr.bf16.mxu0 0
    %488 = vmatpush1.bf16.msra.mxu0 %v464
    %489 = vmatprep.subr.bf16.mxu0 0
    %490 = vmatpush1.bf16.msra.mxu0 0
    %491 = vmatprep.subr.bf16.mxu0 0
    %492 = vmatpush1.bf16.msra.mxu0 0
    %493 = vmatprep.subr.bf16.mxu0 0
    %494 = vmatpush1.bf16.msra.mxu0 0
    %495 = vmatprep.subr.bf16.mxu0 0
    %496 = vmatpush1.bf16.msra.mxu0 0
    %497 = vmatprep.subr.bf16.mxu0 0
    %498 = vmatpush1.bf16.msra.mxu0 0
    %499 = vmatprep.subr.bf16.mxu0 0
    %500 = vmatpush1.bf16.msra.mxu0 0
    %501 = vmatprep.subr.bf16.mxu0 0
    %502 = vmatpush1.bf16.msra.mxu0 0
    %503 = vmatprep.subr.bf16.mxu0 0
    %504 = vmatpush1.bf16.msra.mxu0 0
    %505 = vmatprep.mubr.bf16.mxu0 0
    %506 = vmatmul.mubr.bf16.gmra.mrb[0].mxu0 %v416
    %v507 = vpop.f32.mrb[0].mxu0
    %v508 = vadd.f32 %v423, %v507
    %v509 = vpop.f32.mrb[0].mxu0
    %v510 = vpop.f32.mrb[0].mxu0
    %v511 = vpop.f32.mrb[0].mxu0
    %512 = vdwg.mxu0
    %s513 = scalar_lea.vmem [#allocation4], 192
    %v514 = vld [vmem:[%s513] sm:$0xf]
    %v515 = vld [vmem:[%s513 + $0x4] sm:$0xf]
    %v516 = vld [vmem:[%s513 + $0x8] sm:$0xf]
    %v517 = vld [vmem:[%s513 + $0xc] sm:$0xf]
    %v518 = vld [vmem:[%s513 + $0x10] sm:$0xf]
    %v519 = vld [vmem:[%s513 + $0x14] sm:$0xf]
    %v520 = vld [vmem:[%s513 + $0x18] sm:$0xf]
    %v521 = vld [vmem:[%s513 + $0x1c] sm:$0xf]
    %v522 = vld [vmem:[%s513 + $0x20] sm:$0xf]
    %v523 = vld [vmem:[%s513 + $0x24] sm:$0xf]
    %v524 = vld [vmem:[%s513 + $0x28] sm:$0xf]
    %v525 = vld [vmem:[%s513 + $0x2c] sm:$0xf]
    %v526 = vld [vmem:[%s513 + $0x30] sm:$0xf]
    %v527 = vld [vmem:[%s513 + $0x34] sm:$0xf]
    %v528 = vld [vmem:[%s513 + $0x38] sm:$0xf]
    %v529 = vld [vmem:[%s513 + $0x3c] sm:$0xf]
    %v530 = vpack.c.bf16 %v508, %v508
    %s531 = scalar_lea.vmem %s3, 3
    %v532 = vld [vmem:[%s531] sm:$0x1]
    %v534 = vlaneseq
    %v535 = vshrl.u32 %v534, 7
    %v536 = vsub.s32 0, %v535
    %v537 = vrot.slane %v532, %v536
    %v555 = vunpack.c.l.b16 %v514
    %v556 = vunpack.c.l.b16 %v515
    %v557 = vunpack.c.l.b16 %v516
    %v558 = vunpack.c.l.b16 %v517
    %v559 = vunpack.c.l.b16 %v518
    %v560 = vunpack.c.l.b16 %v519
    %v561 = vunpack.c.l.b16 %v520
    %v562 = vunpack.c.l.b16 %v521
    %v563 = vunpack.c.l.b16 %v522
    %v564 = vunpack.c.l.b16 %v523
    %v565 = vunpack.c.l.b16 %v524
    %v566 = vunpack.c.l.b16 %v525
    %v567 = vunpack.c.l.b16 %v526
    %v568 = vunpack.c.l.b16 %v527
    %v569 = vunpack.c.l.b16 %v528
    %v570 = vunpack.c.l.b16 %v529
    %v571 = vpack.c.b16 %v556, %v555
    %v572 = vpack.c.b16 %v558, %v557
    %v573 = vpack.c.b16 %v560, %v559
    %v574 = vpack.c.b16 %v562, %v561
    %v575 = vpack.c.b16 %v564, %v563
    %v576 = vpack.c.b16 %v566, %v565
    %v577 = vpack.c.b16 %v568, %v567
    %v578 = vpack.c.b16 %v570, %v569
    %587 = vmatprep.subr.bf16.mxu0 0
    %588 = vmatpush1.bf16.msra.mxu0 %v571
    %589 = vmatprep.subr.bf16.mxu0 0
    %590 = vmatpush1.bf16.msra.mxu0 %v572
    %591 = vmatprep.subr.bf16.mxu0 0
    %592 = vmatpush1.bf16.msra.mxu0 %v573
    %593 = vmatprep.subr.bf16.mxu0 0
    %594 = vmatpush1.bf16.msra.mxu0 %v574
    %595 = vmatprep.subr.bf16.mxu0 0
    %596 = vmatpush1.bf16.msra.mxu0 %v575
    %597 = vmatprep.subr.bf16.mxu0 0
    %598 = vmatpush1.bf16.msra.mxu0 %v576
    %599 = vmatprep.subr.bf16.mxu0 0
    %600 = vmatpush1.bf16.msra.mxu0 %v577
    %601 = vmatprep.subr.bf16.mxu0 0
    %602 = vmatpush1.bf16.msra.mxu0 %v578
    %603 = vmatprep.subr.bf16.mxu0 0
    %604 = vmatpush1.bf16.msra.mxu0 0
    %605 = vmatprep.subr.bf16.mxu0 0
    %606 = vmatpush1.bf16.msra.mxu0 0
    %607 = vmatprep.subr.bf16.mxu0 0
    %608 = vmatpush1.bf16.msra.mxu0 0
    %609 = vmatprep.subr.bf16.mxu0 0
    %610 = vmatpush1.bf16.msra.mxu0 0
    %611 = vmatprep.subr.bf16.mxu0 0
    %612 = vmatpush1.bf16.msra.mxu0 0
    %613 = vmatprep.subr.bf16.mxu0 0
    %614 = vmatpush1.bf16.msra.mxu0 0
    %615 = vmatprep.subr.bf16.mxu0 0
    %616 = vmatpush1.bf16.msra.mxu0 0
    %617 = vmatprep.subr.bf16.mxu0 0
    %618 = vmatpush1.bf16.msra.mxu0 0
    %619 = vmatprep.mubr.bf16.mxu0 0
    %620 = vmatmul.mubr.bf16.gmra.mrb[0].mxu0 %v530
    %v621 = vpop.f32.mrb[0].mxu0
    %v622 = vadd.f32 %v537, %v621
    %v623 = vpop.f32.mrb[0].mxu0
    %v624 = vpop.f32.mrb[0].mxu0
    %v625 = vpop.f32.mrb[0].mxu0
    %626 = vdwg.mxu0
    %v627 = vlaneseq
    %v628 = vand.u32 %v627, 127
    %vm629 = vcmp.lt.s32.totalorder %v628, 64
    %630 = vrot.lane.b32.xlu0 %v622, 64
    %v631 = vpop.permute.xlu0 %630
    %v632 = vsel %vm629, 1, 0
    %vm633 = vcmp.eq.s32.totalorder %v632, 1
    %v634 = vsel %vm633, %v631, 0.0
    %v635 = vmul.f32 %v634, 0.5
    %v636 = vmul.f32 %v635, 1.442695
    %v637 = vpow.pop %v636
    %v638 = vadd.f32 %v637, 1e-07
    %v639 = vmul.f32 %v170, %v638
    %v640 = vadd.f32 %v622, %v639
    %s641 = smul.u32 4, 6
    %s642 = smul.u32 %s641, 16
    %s643 = smul.u32 %s642, 1
    %s644 = sshll.u32 %s643, 4
    %645 = dma.done [#allocation3], %s644
    %v646 = vld [vmem:[#allocation2] sm:$0xff]
    %v647 = vld [vmem:[#allocation2 + $0x8] sm:$0xff]
    %v648 = vld [vmem:[#allocation2 + $0x10] sm:$0xff]
    %v649 = vld [vmem:[#allocation2 + $0x18] sm:$0xff]
    %v650 = vld [vmem:[#allocation2 + $0x20] sm:$0xff]
    %v651 = vld [vmem:[#allocation2 + $0x28] sm:$0xff]
    %v652 = vld [vmem:[#allocation2 + $0x30] sm:$0xff]
    %v653 = vld [vmem:[#allocation2 + $0x38] sm:$0xff]
    %v654 = vpack.c.bf16 %v640, %v640
    %s655 = scalar_lea.vmem %s3, 4
    %v656 = vld [vmem:[%s655] sm:$0x1]
    %v658 = vlaneseq
    %v659 = vshrl.u32 %v658, 7
    %v660 = vsub.s32 0, %v659
    %v661 = vrot.slane %v656, %v660
    %663 = vmatprep.subr.bf16.mxu0 0
    %664 = vmatpush1.bf16.msra.mxu0 %v646
    %665 = vmatprep.subr.bf16.mxu0 0
    %666 = vmatpush1.bf16.msra.mxu0 %v647
    %667 = vmatprep.subr.bf16.mxu0 0
    %668 = vmatpush1.bf16.msra.mxu0 %v648
    %669 = vmatprep.subr.bf16.mxu0 0
    %670 = vmatpush1.bf16.msra.mxu0 %v649
    %671 = vmatprep.subr.bf16.mxu0 0
    %672 = vmatpush1.bf16.msra.mxu0 %v650
    %673 = vmatprep.subr.bf16.mxu0 0
    %674 = vmatpush1.bf16.msra.mxu0 %v651
    %675 = vmatprep.subr.bf16.mxu0 0
    %676 = vmatpush1.bf16.msra.mxu0 %v652
    %677 = vmatprep.subr.bf16.mxu0 0
    %678 = vmatpush1.bf16.msra.mxu0 %v653
    %679 = vmatprep.subr.bf16.mxu0 0
    %680 = vmatpush1.bf16.msra.mxu0 0
    %681 = vmatprep.subr.bf16.mxu0 0
    %682 = vmatpush1.bf16.msra.mxu0 0
    %683 = vmatprep.subr.bf16.mxu0 0
    %684 = vmatpush1.bf16.msra.mxu0 0
    %685 = vmatprep.subr.bf16.mxu0 0
    %686 = vmatpush1.bf16.msra.mxu0 0
    %687 = vmatprep.subr.bf16.mxu0 0
    %688 = vmatpush1.bf16.msra.mxu0 0
    %689 = vmatprep.subr.bf16.mxu0 0
    %690 = vmatpush1.bf16.msra.mxu0 0
    %691 = vmatprep.subr.bf16.mxu0 0
    %692 = vmatpush1.bf16.msra.mxu0 0
    %693 = vmatprep.subr.bf16.mxu0 0
    %694 = vmatpush1.bf16.msra.mxu0 0
    %695 = vmatprep.mubr.bf16.mxu0 0
    %696 = vmatmul.mubr.bf16.gmra.mrb[0].mxu0 %v654
    %v697 = vpop.f32.mrb[0].mxu0
    %v698 = vadd.f32 %v661, %v697
    %v699 = vpop.f32.mrb[0].mxu0
    %v700 = vpop.f32.mrb[0].mxu0
    %v701 = vpop.f32.mrb[0].mxu0
    %702 = vdwg.mxu0
    %v703 = vmax.f32 %v698, 0.0
    %s704 = scalar_lea.vmem [#allocation2], 64
    %v705 = vld [vmem:[%s704] sm:$0xff]
    %v706 = vld [vmem:[%s704 + $0x8] sm:$0xff]
    %v707 = vld [vmem:[%s704 + $0x10] sm:$0xff]
    %v708 = vld [vmem:[%s704 + $0x18] sm:$0xff]
    %v709 = vld [vmem:[%s704 + $0x20] sm:$0xff]
    %v710 = vld [vmem:[%s704 + $0x28] sm:$0xff]
    %v711 = vld [vmem:[%s704 + $0x30] sm:$0xff]
    %v712 = vld [vmem:[%s704 + $0x38] sm:$0xff]
    %v713 = vpack.c.bf16 %v703, %v703
    %s714 = scalar_lea.vmem %s3, 5
    %v715 = vld [vmem:[%s714] sm:$0x1]
    %v717 = vlaneseq
    %v718 = vshrl.u32 %v717, 7
    %v719 = vsub.s32 0, %v718
    %v720 = vrot.slane %v715, %v719
    %722 = vmatprep.subr.bf16.mxu0 0
    %723 = vmatpush1.bf16.msra.mxu0 %v705
    %724 = vmatprep.subr.bf16.mxu0 0
    %725 = vmatpush1.bf16.msra.mxu0 %v706
    %726 = vmatprep.subr.bf16.mxu0 0
    %727 = vmatpush1.bf16.msra.mxu0 %v707
    %728 = vmatprep.subr.bf16.mxu0 0
    %729 = vmatpush1.bf16.msra.mxu0 %v708
    %730 = vmatprep.subr.bf16.mxu0 0
    %731 = vmatpush1.bf16.msra.mxu0 %v709
    %732 = vmatprep.subr.bf16.mxu0 0
    %733 = vmatpush1.bf16.msra.mxu0 %v710
    %734 = vmatprep.subr.bf16.mxu0 0
    %735 = vmatpush1.bf16.msra.mxu0 %v711
    %736 = vmatprep.subr.bf16.mxu0 0
    %737 = vmatpush1.bf16.msra.mxu0 %v712
    %738 = vmatprep.subr.bf16.mxu0 0
    %739 = vmatpush1.bf16.msra.mxu0 0
    %740 = vmatprep.subr.bf16.mxu0 0
    %741 = vmatpush1.bf16.msra.mxu0 0
    %742 = vmatprep.subr.bf16.mxu0 0
    %743 = vmatpush1.bf16.msra.mxu0 0
    %744 = vmatprep.subr.bf16.mxu0 0
    %745 = vmatpush1.bf16.msra.mxu0 0
    %746 = vmatprep.subr.bf16.mxu0 0
    %747 = vmatpush1.bf16.msra.mxu0 0
    %748 = vmatprep.subr.bf16.mxu0 0
    %749 = vmatpush1.bf16.msra.mxu0 0
    %750 = vmatprep.subr.bf16.mxu0 0
    %751 = vmatpush1.bf16.msra.mxu0 0
    %752 = vmatprep.subr.bf16.mxu0 0
    %753 = vmatpush1.bf16.msra.mxu0 0
    %754 = vmatprep.mubr.bf16.mxu0 0
    %755 = vmatmul.mubr.bf16.gmra.mrb[0].mxu0 %v713
    %v756 = vpop.f32.mrb[0].mxu0
    %v757 = vadd.f32 %v720, %v756
    %v758 = vpop.f32.mrb[0].mxu0
    %v759 = vpop.f32.mrb[0].mxu0
    %v760 = vpop.f32.mrb[0].mxu0
    %761 = vdwg.mxu0
    %v762 = vmax.f32 %v757, 0.0
    %s763 = scalar_lea.vmem [#allocation2], 128
    %v764 = vld [vmem:[%s763] sm:$0xff]
    %v765 = vld [vmem:[%s763 + $0x8] sm:$0xff]
    %v766 = vld [vmem:[%s763 + $0x10] sm:$0xff]
    %v767 = vld [vmem:[%s763 + $0x18] sm:$0xff]
    %v768 = vld [vmem:[%s763 + $0x20] sm:$0xff]
    %v769 = vld [vmem:[%s763 + $0x28] sm:$0xff]
    %v770 = vld [vmem:[%s763 + $0x30] sm:$0xff]
    %v771 = vld [vmem:[%s763 + $0x38] sm:$0xff]
    %v772 = vpack.c.bf16 %v762, %v762
    %s773 = scalar_lea.vmem %s3, 6
    %v774 = vld [vmem:[%s773] sm:$0x1]
    %v776 = vlaneseq
    %v777 = vshrl.u32 %v776, 7
    %v778 = vsub.s32 0, %v777
    %v779 = vrot.slane %v774, %v778
    %781 = vmatprep.subr.bf16.mxu0 0
    %782 = vmatpush1.bf16.msra.mxu0 %v764
    %783 = vmatprep.subr.bf16.mxu0 0
    %784 = vmatpush1.bf16.msra.mxu0 %v765
    %785 = vmatprep.subr.bf16.mxu0 0
    %786 = vmatpush1.bf16.msra.mxu0 %v766
    %787 = vmatprep.subr.bf16.mxu0 0
    %788 = vmatpush1.bf16.msra.mxu0 %v767
    %789 = vmatprep.subr.bf16.mxu0 0
    %790 = vmatpush1.bf16.msra.mxu0 %v768
    %791 = vmatprep.subr.bf16.mxu0 0
    %792 = vmatpush1.bf16.msra.mxu0 %v769
    %793 = vmatprep.subr.bf16.mxu0 0
    %794 = vmatpush1.bf16.msra.mxu0 %v770
    %795 = vmatprep.subr.bf16.mxu0 0
    %796 = vmatpush1.bf16.msra.mxu0 %v771
    %797 = vmatprep.subr.bf16.mxu0 0
    %798 = vmatpush1.bf16.msra.mxu0 0
    %799 = vmatprep.subr.bf16.mxu0 0
    %800 = vmatpush1.bf16.msra.mxu0 0
    %801 = vmatprep.subr.bf16.mxu0 0
    %802 = vmatpush1.bf16.msra.mxu0 0
    %803 = vmatprep.subr.bf16.mxu0 0
    %804 = vmatpush1.bf16.msra.mxu0 0
    %805 = vmatprep.subr.bf16.mxu0 0
    %806 = vmatpush1.bf16.msra.mxu0 0
    %807 = vmatprep.subr.bf16.mxu0 0
    %808 = vmatpush1.bf16.msra.mxu0 0
    %809 = vmatprep.subr.bf16.mxu0 0
    %810 = vmatpush1.bf16.msra.mxu0 0
    %811 = vmatprep.subr.bf16.mxu0 0
    %812 = vmatpush1.bf16.msra.mxu0 0
    %813 = vmatprep.mubr.bf16.mxu0 0
    %814 = vmatmul.mubr.bf16.gmra.mrb[0].mxu0 %v772
    %v815 = vpop.f32.mrb[0].mxu0
    %v816 = vadd.f32 %v779, %v815
    %v817 = vpop.f32.mrb[0].mxu0
    %v818 = vpop.f32.mrb[0].mxu0
    %v819 = vpop.f32.mrb[0].mxu0
    %820 = vdwg.mxu0
    %v821 = vadd.f32 %v622, %v816
    %v822 = vadd.f32 %v640, %v816
    %s823 = scalar_lea.vmem [#allocation2], 192
    %v824 = vld [vmem:[%s823] sm:$0xff]
    %v825 = vld [vmem:[%s823 + $0x8] sm:$0xff]
    %v826 = vld [vmem:[%s823 + $0x10] sm:$0xff]
    %v827 = vld [vmem:[%s823 + $0x18] sm:$0xff]
    %v828 = vld [vmem:[%s823 + $0x20] sm:$0xff]
    %v829 = vld [vmem:[%s823 + $0x28] sm:$0xff]
    %v830 = vld [vmem:[%s823 + $0x30] sm:$0xff]
    %v831 = vld [vmem:[%s823 + $0x38] sm:$0xff]
    %v832 = vpack.c.bf16 %v822, %v822
    %s833 = scalar_lea.vmem %s3, 7
    %v834 = vld [vmem:[%s833] sm:$0x1]
    %v836 = vlaneseq
    %v837 = vshrl.u32 %v836, 7
    %v838 = vsub.s32 0, %v837
    %v839 = vrot.slane %v834, %v838
    %841 = vmatprep.subr.bf16.mxu0 0
    %842 = vmatpush1.bf16.msra.mxu0 %v824
    %843 = vmatprep.subr.bf16.mxu0 0
    %844 = vmatpush1.bf16.msra.mxu0 %v825
    %845 = vmatprep.subr.bf16.mxu0 0
    %846 = vmatpush1.bf16.msra.mxu0 %v826
    %847 = vmatprep.subr.bf16.mxu0 0
    %848 = vmatpush1.bf16.msra.mxu0 %v827
    %849 = vmatprep.subr.bf16.mxu0 0
    %850 = vmatpush1.bf16.msra.mxu0 %v828
    %851 = vmatprep.subr.bf16.mxu0 0
    %852 = vmatpush1.bf16.msra.mxu0 %v829
    %853 = vmatprep.subr.bf16.mxu0 0
    %854 = vmatpush1.bf16.msra.mxu0 %v830
    %855 = vmatprep.subr.bf16.mxu0 0
    %856 = vmatpush1.bf16.msra.mxu0 %v831
    %857 = vmatprep.subr.bf16.mxu0 0
    %858 = vmatpush1.bf16.msra.mxu0 0
    %859 = vmatprep.subr.bf16.mxu0 0
    %860 = vmatpush1.bf16.msra.mxu0 0
    %861 = vmatprep.subr.bf16.mxu0 0
    %862 = vmatpush1.bf16.msra.mxu0 0
    %863 = vmatprep.subr.bf16.mxu0 0
    %864 = vmatpush1.bf16.msra.mxu0 0
    %865 = vmatprep.subr.bf16.mxu0 0
    %866 = vmatpush1.bf16.msra.mxu0 0
    %867 = vmatprep.subr.bf16.mxu0 0
    %868 = vmatpush1.bf16.msra.mxu0 0
    %869 = vmatprep.subr.bf16.mxu0 0
    %870 = vmatpush1.bf16.msra.mxu0 0
    %871 = vmatprep.subr.bf16.mxu0 0
    %872 = vmatpush1.bf16.msra.mxu0 0
    %873 = vmatprep.mubr.bf16.mxu0 0
    %874 = vmatmul.mubr.bf16.gmra.mrb[0].mxu0 %v832
    %v875 = vpop.f32.mrb[0].mxu0
    %v876 = vadd.f32 %v839, %v875
    %v877 = vpop.f32.mrb[0].mxu0
    %v878 = vpop.f32.mrb[0].mxu0
    %v879 = vpop.f32.mrb[0].mxu0
    %880 = vdwg.mxu0
    %v881 = vmax.f32 %v876, 0.0
    %s882 = scalar_lea.vmem [#allocation2], 256
    %v883 = vld [vmem:[%s882] sm:$0xff]
    %v884 = vld [vmem:[%s882 + $0x8] sm:$0xff]
    %v885 = vld [vmem:[%s882 + $0x10] sm:$0xff]
    %v886 = vld [vmem:[%s882 + $0x18] sm:$0xff]
    %v887 = vld [vmem:[%s882 + $0x20] sm:$0xff]
    %v888 = vld [vmem:[%s882 + $0x28] sm:$0xff]
    %v889 = vld [vmem:[%s882 + $0x30] sm:$0xff]
    %v890 = vld [vmem:[%s882 + $0x38] sm:$0xff]
    %v891 = vpack.c.bf16 %v881, %v881
    %s892 = scalar_lea.vmem %s3, 8
    %v893 = vld [vmem:[%s892] sm:$0x1]
    %v895 = vlaneseq
    %v896 = vshrl.u32 %v895, 7
    %v897 = vsub.s32 0, %v896
    %v898 = vrot.slane %v893, %v897
    %900 = vmatprep.subr.bf16.mxu0 0
    %901 = vmatpush1.bf16.msra.mxu0 %v883
    %902 = vmatprep.subr.bf16.mxu0 0
    %903 = vmatpush1.bf16.msra.mxu0 %v884
    %904 = vmatprep.subr.bf16.mxu0 0
    %905 = vmatpush1.bf16.msra.mxu0 %v885
    %906 = vmatprep.subr.bf16.mxu0 0
    %907 = vmatpush1.bf16.msra.mxu0 %v886
    %908 = vmatprep.subr.bf16.mxu0 0
    %909 = vmatpush1.bf16.msra.mxu0 %v887
    %910 = vmatprep.subr.bf16.mxu0 0
    %911 = vmatpush1.bf16.msra.mxu0 %v888
    %912 = vmatprep.subr.bf16.mxu0 0
    %913 = vmatpush1.bf16.msra.mxu0 %v889
    %914 = vmatprep.subr.bf16.mxu0 0
    %915 = vmatpush1.bf16.msra.mxu0 %v890
    %916 = vmatprep.subr.bf16.mxu0 0
    %917 = vmatpush1.bf16.msra.mxu0 0
    %918 = vmatprep.subr.bf16.mxu0 0
    %919 = vmatpush1.bf16.msra.mxu0 0
    %920 = vmatprep.subr.bf16.mxu0 0
    %921 = vmatpush1.bf16.msra.mxu0 0
    %922 = vmatprep.subr.bf16.mxu0 0
    %923 = vmatpush1.bf16.msra.mxu0 0
    %924 = vmatprep.subr.bf16.mxu0 0
    %925 = vmatpush1.bf16.msra.mxu0 0
    %926 = vmatprep.subr.bf16.mxu0 0
    %927 = vmatpush1.bf16.msra.mxu0 0
    %928 = vmatprep.subr.bf16.mxu0 0
    %929 = vmatpush1.bf16.msra.mxu0 0
    %930 = vmatprep.subr.bf16.mxu0 0
    %931 = vmatpush1.bf16.msra.mxu0 0
    %932 = vmatprep.mubr.bf16.mxu0 0
    %933 = vmatmul.mubr.bf16.gmra.mrb[0].mxu0 %v891
    %v934 = vpop.f32.mrb[0].mxu0
    %v935 = vadd.f32 %v898, %v934
    %v936 = vpop.f32.mrb[0].mxu0
    %v937 = vpop.f32.mrb[0].mxu0
    %v938 = vpop.f32.mrb[0].mxu0
    %939 = vdwg.mxu0
    %v940 = vmax.f32 %v935, 0.0
    %s941 = scalar_lea.vmem [#allocation2], 320
    %v942 = vld [vmem:[%s941] sm:$0xff]
    %v943 = vld [vmem:[%s941 + $0x8] sm:$0xff]
    %v944 = vld [vmem:[%s941 + $0x10] sm:$0xff]
    %v945 = vld [vmem:[%s941 + $0x18] sm:$0xff]
    %v946 = vld [vmem:[%s941 + $0x20] sm:$0xff]
    %v947 = vld [vmem:[%s941 + $0x28] sm:$0xff]
    %v948 = vld [vmem:[%s941 + $0x30] sm:$0xff]
    %v949 = vld [vmem:[%s941 + $0x38] sm:$0xff]
    %v950 = vpack.c.bf16 %v940, %v940
    %s951 = scalar_lea.vmem %s3, 9
    %v952 = vld [vmem:[%s951] sm:$0x1]
    %v954 = vlaneseq
    %v955 = vshrl.u32 %v954, 7
    %v956 = vsub.s32 0, %v955
    %v957 = vrot.slane %v952, %v956
    %959 = vmatprep.subr.bf16.mxu0 0
    %960 = vmatpush1.bf16.msra.mxu0 %v942
    %961 = vmatprep.subr.bf16.mxu0 0
    %962 = vmatpush1.bf16.msra.mxu0 %v943
    %963 = vmatprep.subr.bf16.mxu0 0
    %964 = vmatpush1.bf16.msra.mxu0 %v944
    %965 = vmatprep.subr.bf16.mxu0 0
    %966 = vmatpush1.bf16.msra.mxu0 %v945
    %967 = vmatprep.subr.bf16.mxu0 0
    %968 = vmatpush1.bf16.msra.mxu0 %v946
    %969 = vmatprep.subr.bf16.mxu0 0
    %970 = vmatpush1.bf16.msra.mxu0 %v947
    %971 = vmatprep.subr.bf16.mxu0 0
    %972 = vmatpush1.bf16.msra.mxu0 %v948
    %973 = vmatprep.subr.bf16.mxu0 0
    %974 = vmatpush1.bf16.msra.mxu0 %v949
    %975 = vmatprep.subr.bf16.mxu0 0
    %976 = vmatpush1.bf16.msra.mxu0 0
    %977 = vmatprep.subr.bf16.mxu0 0
    %978 = vmatpush1.bf16.msra.mxu0 0
    %979 = vmatprep.subr.bf16.mxu0 0
    %980 = vmatpush1.bf16.msra.mxu0 0
    %981 = vmatprep.subr.bf16.mxu0 0
    %982 = vmatpush1.bf16.msra.mxu0 0
    %983 = vmatprep.subr.bf16.mxu0 0
    %984 = vmatpush1.bf16.msra.mxu0 0
    %985 = vmatprep.subr.bf16.mxu0 0
    %986 = vmatpush1.bf16.msra.mxu0 0
    %987 = vmatprep.subr.bf16.mxu0 0
    %988 = vmatpush1.bf16.msra.mxu0 0
    %989 = vmatprep.subr.bf16.mxu0 0
    %990 = vmatpush1.bf16.msra.mxu0 0
    %991 = vmatprep.mubr.bf16.mxu0 0
    %992 = vmatmul.mubr.bf16.gmra.mrb[0].mxu0 %v950
    %v993 = vpop.f32.mrb[0].mxu0
    %v994 = vadd.f32 %v957, %v993
    %v995 = vpop.f32.mrb[0].mxu0
    %v996 = vpop.f32.mrb[0].mxu0
    %v997 = vpop.f32.mrb[0].mxu0
    %998 = vdwg.mxu0
    %999 = vst [vmem:[%s5] sm:$0xff] %v821
    %s1000 = scalar_lea.vmem %s5, 8
    %1001 = vst [vmem:[%s1000] sm:$0xff] %v822
    %s1002 = scalar_lea.vmem %s5, 16
    %1003 = vst [vmem:[%s1002] sm:$0xff] %v994
    // Predicated region
    $region56: #{_lambda_.1} parent=1 // pred_check
      _
    $region57: #{_lambda_.1} parent=1 // pred_check_branch
      %1005 = sbr.rel (0) target = $region59
    $region58: #{_lambda_.1} parent=1 // pred_region
      _
    $region59: #{_lambda_.1} parent=1 // pred_fallthru
      _
    // Predicated region
    $region60: #{_lambda_.1} parent=1 // pred_check
      _
    $region61: #{_lambda_.1} parent=1 // pred_check_branch
      %1007 = sbr.rel (0) target = $region63
    $region62: #{_lambda_.1} parent=1 // pred_region
      _
    $region63: #{_lambda_.1} parent=1 // pred_fallthru
      _
    %1008 = vsyncpa [#allocation5], 1
  %1009 = vsyncmov [#allocation3]
  %s1010 = vpop.sfrf %1009
  %p1011 = scmp.eq.s32.totalorder %s1010, 0
  %p1012 = pneg %p1011
  %1014 = shalt.err (%p1012)

</llo_original>
